<compile_context>
chip_gen: v6e
topology: v6e:2x2x1
jax: 0.10.0
libtpu: 0.0.40
codegen_flags: <defaults>
</compile_context>

<pallas_src>
import functools

import jax
import jax.numpy as jnp
import numpy as np
from jax.experimental import pallas as pl
from jax.experimental.pallas import tpu as pltpu


# ----------------------------- config ---------------------------------------
CFG = dict(
    input_dim=20,     # per-channel input feature dim
    linear_dim=32,    # fsmn expansion dim
    proj_dim=16,      # fsmn projection dim
    lorder=4,         # left (past) order
    rorder=1,         # right (future) order
    num_syn=5,        # output classes
    fsmn_layers=3,    # number of DFSMN units
)

LANE = 128            # lane width; decision output padded to this


def _ceil(a, b):
    return -(-a // b) * b


# ----------------------------- weight packing --------------------------------
def pack_weights(params, cfg, C):
    """Pack all weights into a single (rows, lane_w) f32 slab.

    Shared-across-channel matrices become per-channel block-diagonal (kron(I_C, W))
    so the kernel can keep activations in a (time, C*feat) lane-dense layout.
    Returns (slab, meta) with meta[name] = (row_off, rows, cols).
    """
    items = []

    def bd(w):  # block-diagonal: one copy of w per channel
        return jnp.kron(jnp.eye(C, dtype=jnp.float32), w.astype(jnp.float32))

    def lane_tile(v):  # repeat a (r, d) row-vector block per channel along lanes
        return jnp.tile(v.astype(jnp.float32), (1, C))

    for li, (eW, eb, sW, flW, frW) in enumerate(params["layers"]):
        items += [(f"eW{li}", bd(eW)), (f"eb{li}", lane_tile(eb)),
                  (f"sW{li}", bd(sW)),
                  (f"fl{li}", lane_tile(flW)), (f"fr{li}", lane_tile(frW))]
    items += [("e2W", bd(params["e2W"])), ("e2b", lane_tile(params["e2b"]))]

    # decision layer: pad num_syn out to LANE columns so the final store is lane-dense
    dW = params["dW"].astype(jnp.float32)
    db = params["db"].astype(jnp.float32)
    dW_p = jnp.zeros((dW.shape[0], LANE), jnp.float32).at[:, :dW.shape[1]].set(dW)
    db_p = jnp.zeros((1, LANE), jnp.float32).at[:, :db.shape[1]].set(db)
    items += [("dW", dW_p), ("db", db_p)]

    lane_w = _ceil(max(a.shape[1] for _, a in items), LANE)
    meta, blocks, off = {}, [], 0
    for name, arr in items:
        r, c = arr.shape
        r_pad = _ceil(r, 8)
        buf = jnp.zeros((r_pad, lane_w), jnp.float32).at[:r, :c].set(arr)
        blocks.append(buf)
        meta[name] = (off, r, c)
        off += r_pad
    return jnp.concatenate(blocks, axis=0), meta


# ----------------------------- kernel ---------------------------------------
def fsmn_kernel(x_ref, slab_ref, out_ref, pp_ref, *,
                meta, cfg, C, t_tile, Hl, Text, T_total, P0):
    """One grid step == one (batch row, time tile) window of length Text."""
    L, R = cfg["lorder"], cfg["rorder"]
    nlayers = cfg["fsmn_layers"]
    lin, proj = cfg["linear_dim"], cfg["proj_dim"]
    CDp = C * proj
    Tpad = pp_ref.shape[0]

    def w(name):
        off, r, c = meta[name]
        return slab_ref[off:off + r, :c]

    # Global time index of each window row; rows outside [0, T) act as the per-layer
    # zero padding of the reference FSMN (their projection p is masked to zero).
    tj = pl.program_id(1)
    g0 = tj * t_tile - Hl
    row = jax.lax.broadcasted_iota(jnp.int32, (Text, 1), 0) + g0
    valid = jnp.logical_and(row >= 0, row < T_total)

    # Zero only the halo rows of the tap scratch (8-aligned stores); the interior
    # [P0, P0+Text) is overwritten every layer.  Unconditional: every grid step /
    # core must self-initialize its scratch.
    if P0 > 0:
        pp_ref[0:P0, :] = jnp.zeros((P0, CDp), jnp.float32)
    if Tpad - P0 - Text > 0:
        pp_ref[P0 + Text:Tpad, :] = jnp.zeros((Tpad - P0 - Text, CDp), jnp.float32)

    cur = x_ref[...].astype(jnp.float32)          # (Text, C*Din)  lane-dense

    for li in range(nlayers):
        eW, eb = w(f"eW{li}"), w(f"eb{li}")       # block-diag (C*din, C*lin), (1, C*lin)
        sW = w(f"sW{li}")                         # block-diag (C*lin, C*proj)
        fl, fr = w(f"fl{li}"), w(f"fr{li}")       # (L, C*proj), (R, C*proj)

        # expand + relu, then shrink (f32 matmuls; MXU is not the bottleneck here)
        h = jnp.maximum(jnp.dot(cur, eW, preferred_element_type=jnp.float32) + eb, 0.0)
        p = jnp.dot(h, sW, preferred_element_type=jnp.float32)   # (Text, C*proj)

        # FSMN memory: out[t] = p[t] + sum_k fl[k]*p[t-(L-1)+k] + sum_k fr[k]*p[t+1+k]
        pp_ref[P0:P0 + Text, :] = jnp.where(valid, p, 0.0)
        mem = p
        for k in range(L):
            s = P0 - (L - 1) + k
            mem = mem + fl[k:k + 1, :] * pp_ref[s:s + Text, :]
        for k in range(R):
            s = P0 + 1 + k
            mem = mem + fr[k:k + 1, :] * pp_ref[s:s + Text, :]

        if cur.shape[-1] == mem.shape[-1]:        # residual (static shape check)
            mem = cur + mem
        cur = mem                                 # (Text, C*proj)

    # expand2 + relu, channel max-pool (lane-slice max), decision (128-lane-dense)
    e2W, e2b = w("e2W"), w("e2b")
    feat = jnp.maximum(jnp.dot(cur, e2W, preferred_element_type=jnp.float32) + e2b, 0.0)
    pooled = feat[:, 0:lin]
    for c in range(1, C):
        pooled = jnp.maximum(pooled, feat[:, c * lin:(c + 1) * lin])

    z = jnp.dot(pooled, w("dW"), preferred_element_type=jnp.float32) + w("db")
    out_ref[...] = z[Hl:Hl + t_tile, :].astype(out_ref.dtype)   # bf16, lane-dense


# ----------------------------- wrapper ---------------------------------------
def fsmn_sele_v3_pallas(inp, params, cfg, *, t_tile=None):
    """inp: (B, T, C, input_dim) float32 -> (B, T, num_syn) float32."""
    B, T, C, Din = inp.shape
    L, R = cfg["lorder"], cfg["rorder"]
    nlayers = cfg["fsmn_layers"]

    if t_tile is None:
        t_tile = min(128, _ceil(T, 8))
    assert t_tile % 8 == 0
    n_t = -(-T // t_tile)

    Hl = _ceil(nlayers * (L - 1), 8)          # left receptive-field halo (8-aligned)
    Hr = _ceil(nlayers * R, 8)                # right halo (8-aligned)
    Text = Hl + t_tile + Hr                   # extended window length
    P0 = _ceil(L - 1, 8)                      # interior row offset in the tap scratch
    Tpad = P0 + Text + _ceil(max(R, 1), 8)
    CF = C * Din

    slab, meta = pack_weights(params, cfg, C)

    # Fold channel+feature into one lane-dense last dim, then build overlapping
    # time windows (halo comes from neighbouring tiles; global edges are zero-padded).
    x = inp.reshape(B, T, CF).astype(jnp.float32)
    right = (n_t - 1) * t_tile + Text - Hl - T
    xp = jnp.pad(x, ((0, 0), (Hl, right), (0, 0)))
    x_win = jnp.stack([xp[:, j * t_tile:j * t_tile + Text, :] for j in range(n_t)],
                      axis=1)                                   # (B, n_t, Text, CF)

    kernel = functools.partial(fsmn_kernel, meta=meta, cfg=cfg, C=C,
                               t_tile=t_tile, Hl=Hl, Text=Text, T_total=T, P0=P0)

    out = pl.pallas_call(
        kernel,
        out_shape=jax.ShapeDtypeStruct((B, n_t, t_tile, LANE), jnp.bfloat16),
        grid=(B, n_t),
        in_specs=[
            pl.BlockSpec((None, None, Text, CF), lambda bi, tj: (bi, tj, 0, 0)),
            # Grid-invariant weight slab (fetched once; index never changes).
            # TODO(synk): pipeline_mode=pl.Buffered(1) to reclaim its double buffer.
            pl.BlockSpec(slab.shape, lambda bi, tj: (0, 0)),
        ],
        out_specs=pl.BlockSpec((None, None, t_tile, LANE),
                               lambda bi, tj: (bi, tj, 0, 0)),
        scratch_shapes=[pltpu.VMEM((Tpad, C * cfg["proj_dim"]), jnp.float32)],
        compiler_params=pltpu.CompilerParams(
            dimension_semantics=("parallel", "parallel"),
            # TODO(synk): for large production tiles raise vmem_limit_bytes
            # (~64-100 MiB on v5e/v6e, <=48 MiB on v7x) and sweep t_tile upward.
        ),
    )(x_win, slab)

    out = out.reshape(B, n_t * t_tile, LANE)[:, :T, :cfg["num_syn"]]
    return out.astype(jnp.float32)


# ----------------------------- reference (plain JAX, f32) ---------------------
def fsmn_sele_v3_ref(inp, params, cfg):
    B, T, C, Din = inp.shape
    L, R = cfg["lorder"], cfg["rorder"]
    feats = []
    for n in range(C):
        cur = inp[:, :, n, :]
        for (eW, eb, sW, flW, frW) in params["layers"]:
            h = jax.nn.relu(cur @ eW + eb)
            p = h @ sW
            pp = jnp.pad(p, ((0, 0), (L - 1, R), (0, 0)))
            mem = p
            for k in range(L):
                mem = mem + flW[k] * pp[:, k:k + T, :]
            for k in range(R):
                mem = mem + frW[k] * pp[:, L + k:L + k + T, :]
            if cur.shape[-1] == mem.shape[-1]:
                mem = cur + mem
            cur = mem
        feats.append(jax.nn.relu(cur @ params["e2W"] + params["e2b"]))
    x = jnp.stack(feats, axis=2)                  # (B, T, C, linear)
    y = jnp.max(x, axis=2)                        # MaxPool over channels
    return y @ params["dW"] + params["db"]


# ----------------------------- params ----------------------------------------
def init_params(key, cfg):
    def nrm(k, shape, scale=0.1):
        return scale * jax.random.normal(k, shape, dtype=jnp.float32)

    keys = iter(jax.random.split(key, 128))
    layers = []
    din = cfg["input_dim"]
    for _ in range(cfg["fsmn_layers"]):
        eW = nrm(next(keys), (din, cfg["linear_dim"]))
        eb = nrm(next(keys), (1, cfg["linear_dim"]))
        sW = nrm(next(keys), (cfg["linear_dim"], cfg["proj_dim"]))
        flW = nrm(next(keys), (cfg["lorder"], cfg["proj_dim"]))
        frW = nrm(next(keys), (cfg["rorder"], cfg["proj_dim"]))
        layers.append((eW, eb, sW, flW, frW))
        din = cfg["proj_dim"]
    return dict(
        layers=layers,
        e2W=nrm(next(keys), (cfg["proj_dim"], cfg["linear_dim"])),
        e2b=nrm(next(keys), (1, cfg["linear_dim"])),
        dW=nrm(next(keys), (cfg["linear_dim"], cfg["num_syn"])),
        db=nrm(next(keys), (1, cfg["num_syn"])),
    )


# ----------------------------- main -------------------------------------------
if __name__ == "__main__":
    B, T, C = 2, 16, 3
    key = jax.random.PRNGKey(0)
    k_x, k_p = jax.random.split(key)
    x = jax.random.normal(k_x, (B, T, C, CFG["input_dim"]), dtype=jnp.float32)
    params = init_params(k_p, CFG)

    # t_tile=8 -> 2 time tiles per batch row: exercises the halo/mask path and
    # gives a 4-step parallel grid (DMA/compute pipelining, v7x 2-TC friendly).
    out = jax.block_until_ready(fsmn_sele_v3_pallas(x, params, CFG, t_tile=8))
    ref = jax.block_until_ready(fsmn_sele_v3_ref(x, params, CFG))

    assert out.shape == (B, T, CFG["num_syn"])
    # Kernel matmuls are f32; remaining mismatch is dominated by the bf16 output
    # store and default TPU matmul precision in the pure-JAX reference.
    np.testing.assert_allclose(np.asarray(out), np.asarray(ref), rtol=2e-2, atol=2e-2)

    print("KERNEL_OK")
</pallas_src>

<mosaic_0001>
module attributes {stable_mosaic.version = 11 : i64} {
  func.func @fsmn_kernel(%arg0: i32, %arg1: i32, %arg2: memref<1x1x32x60xf32, #tpu.memory_space<vmem>>, %arg3: memref<616x128xf32, #tpu.memory_space<vmem>>, %arg4: memref<1x1x8x128xbf16, #tpu.memory_space<vmem>>, %arg5: memref<48x48xf32, #tpu.memory_space<vmem>>) attributes {dimension_semantics = [#tpu.dimension_semantics<parallel>, #tpu.dimension_semantics<parallel>], iteration_bounds = array<i64: 2, 2>, scalar_prefetch = 0 : i64, scratch_operands = 1 : i64, tpu.core_type = #tpu.core_type<tc>, window_params = [{transform_indices = @transform_0, window_bounds = array<i64: 1, 1, 32, 60>}, {pipeline_mode = #tpu.pipeline_mode<synchronous>, transform_indices = @transform_1, window_bounds = array<i64: 616, 128>}, {transform_indices = @transform_2, window_bounds = array<i64: 1, 1, 8, 128>}]} {
    %c8_i32 = arith.constant 8 : i32
    %0 = arith.muli %arg1, %c8_i32 : i32
    %c16_i32 = arith.constant 16 : i32
    %1 = arith.subi %0, %c16_i32 : i32
    %2 = tpu.iota {dimensions = array<i32: 0>} : vector<32x1xi32>
    %3 = vector.broadcast %1 : i32 to vector<32x1xi32>
    %4 = arith.addi %2, %3 : vector<32x1xi32>
    %c0_i32 = arith.constant 0 : i32
    %5 = vector.broadcast %c0_i32 : i32 to vector<32x1xi32>
    %6 = arith.cmpi sge, %4, %5 : vector<32x1xi32>
    %c16_i32_0 = arith.constant 16 : i32
    %7 = vector.broadcast %c16_i32_0 : i32 to vector<32x1xi32>
    %8 = arith.cmpi slt, %4, %7 : vector<32x1xi32>
    %9 = arith.andi %6, %8 : vector<32x1xi1>
    %cst = arith.constant 0.000000e+00 : f32
    %10 = vector.broadcast %cst : f32 to vector<8x48xf32>
    %c0 = arith.constant 0 : index
    %c0_1 = arith.constant 0 : index
    %11 = vector.load %arg5[%c0, %c0_1] : memref<48x48xf32, #tpu.memory_space<vmem>>, vector<8x48xf32>
    tpu.vector_store %arg5[%c0, %c0_1], %10 {strides = array<i32>} : memref<48x48xf32, #tpu.memory_space<vmem>>, vector<8x48xf32>,
    %cst_2 = arith.constant 0.000000e+00 : f32
    %12 = vector.broadcast %cst_2 : f32 to vector<8x48xf32>
    %c40 = arith.constant 40 : index
    %c0_3 = arith.constant 0 : index
    %13 = vector.load %arg5[%c40, %c0_3] : memref<48x48xf32, #tpu.memory_space<vmem>>, vector<8x48xf32>
    tpu.vector_store %arg5[%c40, %c0_3], %12 {strides = array<i32>} : memref<48x48xf32, #tpu.memory_space<vmem>>, vector<8x48xf32>,
    %c0_4 = arith.constant 0 : index
    %c0_5 = arith.constant 0 : index
    %c0_6 = arith.constant 0 : index
    %c0_7 = arith.constant 0 : index
    %14 = vector.load %arg2[%c0_4, %c0_5, %c0_6, %c0_7] : memref<1x1x32x60xf32, #tpu.memory_space<vmem>>, vector<1x1x32x60xf32>
    %15 = vector.shape_cast %14 : vector<1x1x32x60xf32> to vector<32x60xf32>
    %c0_8 = arith.constant 0 : index
    %c0_9 = arith.constant 0 : index
    %16 = vector.load %arg3[%c0_8, %c0_9] : memref<616x128xf32, #tpu.memory_space<vmem>>, vector<60x96xf32>
    %c64 = arith.constant 64 : index
    %c0_10 = arith.constant 0 : index
    %17 = vector.load %arg3[%c64, %c0_10] : memref<616x128xf32, #tpu.memory_space<vmem>>, vector<1x96xf32>
    %c72 = arith.constant 72 : index
    %c0_11 = arith.constant 0 : index
    %18 = vector.load %arg3[%c72, %c0_11] : memref<616x128xf32, #tpu.memory_space<vmem>>, vector<96x48xf32>
    %c168 = arith.constant 168 : index
    %c0_12 = arith.constant 0 : index
    %19 = vector.load %arg3[%c168, %c0_12] : memref<616x128xf32, #tpu.memory_space<vmem>>, vector<4x48xf32>
    %c176 = arith.constant 176 : index
    %c0_13 = arith.constant 0 : index
    %20 = vector.load %arg3[%c176, %c0_13] : memref<616x128xf32, #tpu.memory_space<vmem>>, vector<1x48xf32>
    %cst_14 = arith.constant dense<0.000000e+00> : vector<32x96xf32>
    %21 = tpu.matmul %15, %16, %cst_14 {dimension_numbers = #tpu.dot_dimension_numbers<[1], [0], [0], [1], [0, 0, 1, 1], [], []>} : vector<32x60xf32>, vector<60x96xf32>, vector<32x96xf32> -> vector<32x96xf32>
    %22 = vector.broadcast %17 : vector<1x96xf32> to vector<32x96xf32>
    %23 = arith.addf %21, %22 : vector<32x96xf32>
    %cst_15 = arith.constant 0.000000e+00 : f32
    %24 = vector.broadcast %cst_15 : f32 to vector<32x96xf32>
    %25 = arith.maximumf %23, %24 : vector<32x96xf32>
    %cst_16 = arith.constant dense<0.000000e+00> : vector<32x48xf32>
    %26 = tpu.matmul %25, %18, %cst_16 {dimension_numbers = #tpu.dot_dimension_numbers<[1], [0], [0], [1], [0, 0, 1, 1], [], []>} : vector<32x96xf32>, vector<96x48xf32>, vector<32x48xf32> -> vector<32x48xf32>
    %cst_17 = arith.constant 0.000000e+00 : f32
    %27 = vector.shape_cast %9 : vector<32x1xi1> to vector<32x1xi1>
    %28 = vector.broadcast %27 : vector<32x1xi1> to vector<32x48xi1>
    %29 = vector.broadcast %cst_17 : f32 to vector<32x48xf32>
    %30 = arith.select %28, %26, %29 : vector<32x48xi1>, vector<32x48xf32>
    %c8 = arith.constant 8 : index
    %c0_18 = arith.constant 0 : index
    %31 = vector.load %arg5[%c8, %c0_18] : memref<48x48xf32, #tpu.memory_space<vmem>>, vector<32x48xf32>
    tpu.vector_store %arg5[%c8, %c0_18], %30 {strides = array<i32>} : memref<48x48xf32, #tpu.memory_space<vmem>>, vector<32x48xf32>,
    %32 = vector.extract_strided_slice %19 {offsets = [0, 0], sizes = [1, 48], strides = [1, 1]} : vector<4x48xf32> to vector<1x48xf32>
    %c5 = arith.constant 5 : index
    %c0_19 = arith.constant 0 : index
    %33 = vector.load %arg5[%c5, %c0_19] : memref<48x48xf32, #tpu.memory_space<vmem>>, vector<32x48xf32>
    %34 = vector.broadcast %32 : vector<1x48xf32> to vector<32x48xf32>
    %35 = arith.mulf %34, %33 : vector<32x48xf32>
    %36 = arith.addf %26, %35 : vector<32x48xf32>
    %37 = vector.extract_strided_slice %19 {offsets = [1, 0], sizes = [1, 48], strides = [1, 1]} : vector<4x48xf32> to vector<1x48xf32>
    %c6 = arith.constant 6 : index
    %c0_20 = arith.constant 0 : index
    %38 = vector.load %arg5[%c6, %c0_20] : memref<48x48xf32, #tpu.memory_space<vmem>>, vector<32x48xf32>
    %39 = vector.broadcast %37 : vector<1x48xf32> to vector<32x48xf32>
    %40 = arith.mulf %39, %38 : vector<32x48xf32>
    %41 = arith.addf %36, %40 : vector<32x48xf32>
    %42 = vector.extract_strided_slice %19 {offsets = [2, 0], sizes = [1, 48], strides = [1, 1]} : vector<4x48xf32> to vector<1x48xf32>
    %c7 = arith.constant 7 : index
    %c0_21 = arith.constant 0 : index
    %43 = vector.load %arg5[%c7, %c0_21] : memref<48x48xf32, #tpu.memory_space<vmem>>, vector<32x48xf32>
    %44 = vector.broadcast %42 : vector<1x48xf32> to vector<32x48xf32>
    %45 = arith.mulf %44, %43 : vector<32x48xf32>
    %46 = arith.addf %41, %45 : vector<32x48xf32>
    %47 = vector.extract_strided_slice %19 {offsets = [3, 0], sizes = [1, 48], strides = [1, 1]} : vector<4x48xf32> to vector<1x48xf32>
    %c8_22 = arith.constant 8 : index
    %c0_23 = arith.constant 0 : index
    %48 = vector.load %arg5[%c8_22, %c0_23] : memref<48x48xf32, #tpu.memory_space<vmem>>, vector<32x48xf32>
    %49 = vector.broadcast %47 : vector<1x48xf32> to vector<32x48xf32>
    %50 = arith.mulf %49, %48 : vector<32x48xf32>
    %51 = arith.addf %46, %50 : vector<32x48xf32>
    %c9 = arith.constant 9 : index
    %c0_24 = arith.constant 0 : index
    %52 = vector.load %arg5[%c9, %c0_24] : memref<48x48xf32, #tpu.memory_space<vmem>>, vector<32x48xf32>
    %53 = vector.broadcast %20 : vector<1x48xf32> to vector<32x48xf32>
    %54 = arith.mulf %53, %52 : vector<32x48xf32>
    %55 = arith.addf %51, %54 : vector<32x48xf32>
    %c184 = arith.constant 184 : index
    %c0_25 = arith.constant 0 : index
    %56 = vector.load %arg3[%c184, %c0_25] : memref<616x128xf32, #tpu.memory_space<vmem>>, vector<48x96xf32>
    %c232 = arith.constant 232 : index
    %c0_26 = arith.constant 0 : index
    %57 = vector.load %arg3[%c232, %c0_26] : memref<616x128xf32, #tpu.memory_space<vmem>>, vector<1x96xf32>
    %c240 = arith.constant 240 : index
    %c0_27 = arith.constant 0 : index
    %58 = vector.load %arg3[%c240, %c0_27] : memref<616x128xf32, #tpu.memory_space<vmem>>, vector<96x48xf32>
    %c336 = arith.constant 336 : index
    %c0_28 = arith.constant 0 : index
    %59 = vector.load %arg3[%c336, %c0_28] : memref<616x128xf32, #tpu.memory_space<vmem>>, vector<4x48xf32>
    %c344 = arith.constant 344 : index
    %c0_29 = arith.constant 0 : index
    %60 = vector.load %arg3[%c344, %c0_29] : memref<616x128xf32, #tpu.memory_space<vmem>>, vector<1x48xf32>
    %cst_30 = arith.constant dense<0.000000e+00> : vector<32x96xf32>
    %61 = tpu.matmul %55, %56, %cst_30 {dimension_numbers = #tpu.dot_dimension_numbers<[1], [0], [0], [1], [0, 0, 1, 1], [], []>} : vector<32x48xf32>, vector<48x96xf32>, vector<32x96xf32> -> vector<32x96xf32>
    %62 = vector.broadcast %57 : vector<1x96xf32> to vector<32x96xf32>
    %63 = arith.addf %61, %62 : vector<32x96xf32>
    %cst_31 = arith.constant 0.000000e+00 : f32
    %64 = vector.broadcast %cst_31 : f32 to vector<32x96xf32>
    %65 = arith.maximumf %63, %64 : vector<32x96xf32>
    %cst_32 = arith.constant dense<0.000000e+00> : vector<32x48xf32>
    %66 = tpu.matmul %65, %58, %cst_32 {dimension_numbers = #tpu.dot_dimension_numbers<[1], [0], [0], [1], [0, 0, 1, 1], [], []>} : vector<32x96xf32>, vector<96x48xf32>, vector<32x48xf32> -> vector<32x48xf32>
    %cst_33 = arith.constant 0.000000e+00 : f32
    %67 = vector.shape_cast %9 : vector<32x1xi1> to vector<32x1xi1>
    %68 = vector.broadcast %67 : vector<32x1xi1> to vector<32x48xi1>
    %69 = vector.broadcast %cst_33 : f32 to vector<32x48xf32>
    %70 = arith.select %68, %66, %69 : vector<32x48xi1>, vector<32x48xf32>
    %c8_34 = arith.constant 8 : index
    %c0_35 = arith.constant 0 : index
    %71 = vector.load %arg5[%c8_34, %c0_35] : memref<48x48xf32, #tpu.memory_space<vmem>>, vector<32x48xf32>
    tpu.vector_store %arg5[%c8_34, %c0_35], %70 {strides = array<i32>} : memref<48x48xf32, #tpu.memory_space<vmem>>, vector<32x48xf32>,
    %72 = vector.extract_strided_slice %59 {offsets = [0, 0], sizes = [1, 48], strides = [1, 1]} : vector<4x48xf32> to vector<1x48xf32>
    %c5_36 = arith.constant 5 : index
    %c0_37 = arith.constant 0 : index
    %73 = vector.load %arg5[%c5_36, %c0_37] : memref<48x48xf32, #tpu.memory_space<vmem>>, vector<32x48xf32>
    %74 = vector.broadcast %72 : vector<1x48xf32> to vector<32x48xf32>
    %75 = arith.mulf %74, %73 : vector<32x48xf32>
    %76 = arith.addf %66, %75 : vector<32x48xf32>
    %77 = vector.extract_strided_slice %59 {offsets = [1, 0], sizes = [1, 48], strides = [1, 1]} : vector<4x48xf32> to vector<1x48xf32>
    %c6_38 = arith.constant 6 : index
    %c0_39 = arith.constant 0 : index
    %78 = vector.load %arg5[%c6_38, %c0_39] : memref<48x48xf32, #tpu.memory_space<vmem>>, vector<32x48xf32>
    %79 = vector.broadcast %77 : vector<1x48xf32> to vector<32x48xf32>
    %80 = arith.mulf %79, %78 : vector<32x48xf32>
    %81 = arith.addf %76, %80 : vector<32x48xf32>
    %82 = vector.extract_strided_slice %59 {offsets = [2, 0], sizes = [1, 48], strides = [1, 1]} : vector<4x48xf32> to vector<1x48xf32>
    %c7_40 = arith.constant 7 : index
    %c0_41 = arith.constant 0 : index
    %83 = vector.load %arg5[%c7_40, %c0_41] : memref<48x48xf32, #tpu.memory_space<vmem>>, vector<32x48xf32>
    %84 = vector.broadcast %82 : vector<1x48xf32> to vector<32x48xf32>
    %85 = arith.mulf %84, %83 : vector<32x48xf32>
    %86 = arith.addf %81, %85 : vector<32x48xf32>
    %87 = vector.extract_strided_slice %59 {offsets = [3, 0], sizes = [1, 48], strides = [1, 1]} : vector<4x48xf32> to vector<1x48xf32>
    %c8_42 = arith.constant 8 : index
    %c0_43 = arith.constant 0 : index
    %88 = vector.load %arg5[%c8_42, %c0_43] : memref<48x48xf32, #tpu.memory_space<vmem>>, vector<32x48xf32>
    %89 = vector.broadcast %87 : vector<1x48xf32> to vector<32x48xf32>
    %90 = arith.mulf %89, %88 : vector<32x48xf32>
    %91 = arith.addf %86, %90 : vector<32x48xf32>
    %c9_44 = arith.constant 9 : index
    %c0_45 = arith.constant 0 : index
    %92 = vector.load %arg5[%c9_44, %c0_45] : memref<48x48xf32, #tpu.memory_space<vmem>>, vector<32x48xf32>
    %93 = vector.broadcast %60 : vector<1x48xf32> to vector<32x48xf32>
    %94 = arith.mulf %93, %92 : vector<32x48xf32>
    %95 = arith.addf %91, %94 : vector<32x48xf32>
    %96 = arith.addf %55, %95 : vector<32x48xf32>
    %c352 = arith.constant 352 : index
    %c0_46 = arith.constant 0 : index
    %97 = vector.load %arg3[%c352, %c0_46] : memref<616x128xf32, #tpu.memory_space<vmem>>, vector<48x96xf32>
    %c400 = arith.constant 400 : index
    %c0_47 = arith.constant 0 : index
    %98 = vector.load %arg3[%c400, %c0_47] : memref<616x128xf32, #tpu.memory_space<vmem>>, vector<1x96xf32>
    %c408 = arith.constant 408 : index
    %c0_48 = arith.constant 0 : index
    %99 = vector.load %arg3[%c408, %c0_48] : memref<616x128xf32, #tpu.memory_space<vmem>>, vector<96x48xf32>
    %c504 = arith.constant 504 : index
    %c0_49 = arith.constant 0 : index
    %100 = vector.load %arg3[%c504, %c0_49] : memref<616x128xf32, #tpu.memory_space<vmem>>, vector<4x48xf32>
    %c512 = arith.constant 512 : index
    %c0_50 = arith.constant 0 : index
    %101 = vector.load %arg3[%c512, %c0_50] : memref<616x128xf32, #tpu.memory_space<vmem>>, vector<1x48xf32>
    %cst_51 = arith.constant dense<0.000000e+00> : vector<32x96xf32>
    %102 = tpu.matmul %96, %97, %cst_51 {dimension_numbers = #tpu.dot_dimension_numbers<[1], [0], [0], [1], [0, 0, 1, 1], [], []>} : vector<32x48xf32>, vector<48x96xf32>, vector<32x96xf32> -> vector<32x96xf32>
    %103 = vector.broadcast %98 : vector<1x96xf32> to vector<32x96xf32>
    %104 = arith.addf %102, %103 : vector<32x96xf32>
    %cst_52 = arith.constant 0.000000e+00 : f32
    %105 = vector.broadcast %cst_52 : f32 to vector<32x96xf32>
    %106 = arith.maximumf %104, %105 : vector<32x96xf32>
    %cst_53 = arith.constant dense<0.000000e+00> : vector<32x48xf32>
    %107 = tpu.matmul %106, %99, %cst_53 {dimension_numbers = #tpu.dot_dimension_numbers<[1], [0], [0], [1], [0, 0, 1, 1], [], []>} : vector<32x96xf32>, vector<96x48xf32>, vector<32x48xf32> -> vector<32x48xf32>
    %cst_54 = arith.constant 0.000000e+00 : f32
    %108 = vector.shape_cast %9 : vector<32x1xi1> to vector<32x1xi1>
    %109 = vector.broadcast %108 : vector<32x1xi1> to vector<32x48xi1>
    %110 = vector.broadcast %cst_54 : f32 to vector<32x48xf32>
    %111 = arith.select %109, %107, %110 : vector<32x48xi1>, vector<32x48xf32>
    %c8_55 = arith.constant 8 : index
    %c0_56 = arith.constant 0 : index
    %112 = vector.load %arg5[%c8_55, %c0_56] : memref<48x48xf32, #tpu.memory_space<vmem>>, vector<32x48xf32>
    tpu.vector_store %arg5[%c8_55, %c0_56], %111 {strides = array<i32>} : memref<48x48xf32, #tpu.memory_space<vmem>>, vector<32x48xf32>,
    %113 = vector.extract_strided_slice %100 {offsets = [0, 0], sizes = [1, 48], strides = [1, 1]} : vector<4x48xf32> to vector<1x48xf32>
    %c5_57 = arith.constant 5 : index
    %c0_58 = arith.constant 0 : index
    %114 = vector.load %arg5[%c5_57, %c0_58] : memref<48x48xf32, #tpu.memory_space<vmem>>, vector<32x48xf32>
    %115 = vector.broadcast %113 : vector<1x48xf32> to vector<32x48xf32>
    %116 = arith.mulf %115, %114 : vector<32x48xf32>
    %117 = arith.addf %107, %116 : vector<32x48xf32>
    %118 = vector.extract_strided_slice %100 {offsets = [1, 0], sizes = [1, 48], strides = [1, 1]} : vector<4x48xf32> to vector<1x48xf32>
    %c6_59 = arith.constant 6 : index
    %c0_60 = arith.constant 0 : index
    %119 = vector.load %arg5[%c6_59, %c0_60] : memref<48x48xf32, #tpu.memory_space<vmem>>, vector<32x48xf32>
    %120 = vector.broadcast %118 : vector<1x48xf32> to vector<32x48xf32>
    %121 = arith.mulf %120, %119 : vector<32x48xf32>
    %122 = arith.addf %117, %121 : vector<32x48xf32>
    %123 = vector.extract_strided_slice %100 {offsets = [2, 0], sizes = [1, 48], strides = [1, 1]} : vector<4x48xf32> to vector<1x48xf32>
    %c7_61 = arith.constant 7 : index
    %c0_62 = arith.constant 0 : index
    %124 = vector.load %arg5[%c7_61, %c0_62] : memref<48x48xf32, #tpu.memory_space<vmem>>, vector<32x48xf32>
    %125 = vector.broadcast %123 : vector<1x48xf32> to vector<32x48xf32>
    %126 = arith.mulf %125, %124 : vector<32x48xf32>
    %127 = arith.addf %122, %126 : vector<32x48xf32>
    %128 = vector.extract_strided_slice %100 {offsets = [3, 0], sizes = [1, 48], strides = [1, 1]} : vector<4x48xf32> to vector<1x48xf32>
    %c8_63 = arith.constant 8 : index
    %c0_64 = arith.constant 0 : index
    %129 = vector.load %arg5[%c8_63, %c0_64] : memref<48x48xf32, #tpu.memory_space<vmem>>, vector<32x48xf32>
    %130 = vector.broadcast %128 : vector<1x48xf32> to vector<32x48xf32>
    %131 = arith.mulf %130, %129 : vector<32x48xf32>
    %132 = arith.addf %127, %131 : vector<32x48xf32>
    %c9_65 = arith.constant 9 : index
    %c0_66 = arith.constant 0 : index
    %133 = vector.load %arg5[%c9_65, %c0_66] : memref<48x48xf32, #tpu.memory_space<vmem>>, vector<32x48xf32>
    %134 = vector.broadcast %101 : vector<1x48xf32> to vector<32x48xf32>
    %135 = arith.mulf %134, %133 : vector<32x48xf32>
    %136 = arith.addf %132, %135 : vector<32x48xf32>
    %137 = arith.addf %96, %136 : vector<32x48xf32>
    %c520 = arith.constant 520 : index
    %c0_67 = arith.constant 0 : index
    %138 = vector.load %arg3[%c520, %c0_67] : memref<616x128xf32, #tpu.memory_space<vmem>>, vector<48x96xf32>
    %c568 = arith.constant 568 : index
    %c0_68 = arith.constant 0 : index
    %139 = vector.load %arg3[%c568, %c0_68] : memref<616x128xf32, #tpu.memory_space<vmem>>, vector<1x96xf32>
    %cst_69 = arith.constant dense<0.000000e+00> : vector<32x96xf32>
    %140 = tpu.matmul %137, %138, %cst_69 {dimension_numbers = #tpu.dot_dimension_numbers<[1], [0], [0], [1], [0, 0, 1, 1], [], []>} : vector<32x48xf32>, vector<48x96xf32>, vector<32x96xf32> -> vector<32x96xf32>
    %141 = vector.broadcast %139 : vector<1x96xf32> to vector<32x96xf32>
    %142 = arith.addf %140, %141 : vector<32x96xf32>
    %cst_70 = arith.constant 0.000000e+00 : f32
    %143 = vector.broadcast %cst_70 : f32 to vector<32x96xf32>
    %144 = arith.maximumf %142, %143 : vector<32x96xf32>
    %145 = vector.extract_strided_slice %144 {offsets = [0, 0], sizes = [32, 32], strides = [1, 1]} : vector<32x96xf32> to vector<32x32xf32>
    %146 = vector.extract_strided_slice %144 {offsets = [0, 32], sizes = [32, 32], strides = [1, 1]} : vector<32x96xf32> to vector<32x32xf32>
    %147 = arith.maximumf %145, %146 : vector<32x32xf32>
    %148 = vector.extract_strided_slice %144 {offsets = [0, 64], sizes = [32, 32], strides = [1, 1]} : vector<32x96xf32> to vector<32x32xf32>
    %149 = arith.maximumf %147, %148 : vector<32x32xf32>
    %c576 = arith.constant 576 : index
    %c0_71 = arith.constant 0 : index
    %150 = vector.load %arg3[%c576, %c0_71] : memref<616x128xf32, #tpu.memory_space<vmem>>, vector<32x128xf32>
    %cst_72 = arith.constant dense<0.000000e+00> : vector<32x128xf32>
    %151 = tpu.matmul %149, %150, %cst_72 {dimension_numbers = #tpu.dot_dimension_numbers<[1], [0], [0], [1], [0, 0, 1, 1], [], []>} : vector<32x32xf32>, vector<32x128xf32>, vector<32x128xf32> -> vector<32x128xf32>
    %c608 = arith.constant 608 : index
    %c0_73 = arith.constant 0 : index
    %152 = vector.load %arg3[%c608, %c0_73] : memref<616x128xf32, #tpu.memory_space<vmem>>, vector<1x128xf32>
    %153 = vector.broadcast %152 : vector<1x128xf32> to vector<32x128xf32>
    %154 = arith.addf %151, %153 : vector<32x128xf32>
    %155 = vector.extract_strided_slice %154 {offsets = [16, 0], sizes = [8, 128], strides = [1, 1]} : vector<32x128xf32> to vector<8x128xf32>
    %156 = arith.truncf %155 : vector<8x128xf32> to vector<8x128xbf16>
    %c0_74 = arith.constant 0 : index
    %c0_75 = arith.constant 0 : index
    %c0_76 = arith.constant 0 : index
    %c0_77 = arith.constant 0 : index
    %157 = vector.load %arg4[%c0_74, %c0_75, %c0_76, %c0_77] : memref<1x1x8x128xbf16, #tpu.memory_space<vmem>>, vector<1x1x8x128xbf16>
    %158 = vector.shape_cast %157 : vector<1x1x8x128xbf16> to vector<8x128xbf16>
    %159 = vector.shape_cast %156 : vector<8x128xbf16> to vector<1x1x8x128xbf16>
    tpu.vector_store %arg4[%c0_74, %c0_75, %c0_76, %c0_77], %159 {strides = array<i32>} : memref<1x1x8x128xbf16, #tpu.memory_space<vmem>>, vector<1x1x8x128xbf16>,
    return
  }
  func.func @transform_0(%arg0: i32, %arg1: i32) -> (i32, i32, i32, i32) {
    %c0_i32 = arith.constant 0 : i32
    %c0_i32_0 = arith.constant 0 : i32
    %c0_i32_1 = arith.constant 0 : i32
    return %arg0, %arg1, %c0_i32, %c0_i32_0 : i32, i32, i32, i32
  }
  func.func @transform_1(%arg0: i32, %arg1: i32) -> (i32, i32) {
    %c0_i32 = arith.constant 0 : i32
    %c0_i32_0 = arith.constant 0 : i32
    %c0_i32_1 = arith.constant 0 : i32
    return %c0_i32, %c0_i32_0 : i32, i32
  }
  func.func @transform_2(%arg0: i32, %arg1: i32) -> (i32, i32, i32, i32) {
    %c0_i32 = arith.constant 0 : i32
    %c0_i32_0 = arith.constant 0 : i32
    %c0_i32_1 = arith.constant 0 : i32
    return %arg0, %arg1, %c0_i32, %c0_i32_0 : i32, i32, i32, i32
  }
}

</mosaic_0001>

<llo_original>
// kernel: tpu_custom_call.1
$region0: #{tpu_custom_call.1}
  #allocation0 [shape = 'u32[]', space=smem, size = 0x4, offset = 0x4, fixed_abs, tag = 'smem constant byte address 0x4 - core index']
  #allocation1 [shape = 'u32[144,128]{1,0:T(1,128)}', space=vmem, size = 0x12000, scoped, tag = 'internal scratch']
  #allocation2 [shape = 'f32[48,48]{1,0:T(8,128)}', space=vmem, size = 0x6000, scoped, tag = 'scratch operand']
  %s0 = inlined_call_operand.hbm [shape: f32[2,2,32,60], index: 0, kind: input, shape index: {}]
  %s1 = inlined_call_operand.hbm [shape: f32[616,128], index: 1, kind: input, shape index: {}]
  %s2 = inlined_call_operand.hbm [shape: bf16[2,2,8,128], index: 2, kind: output, shape index: {}]
  %s3 = sld [smem:[#allocation0]]
  $region49: #{tpu_custom_call.1} parent=0
    _
  %s5 = ssub.s32 1, %s3
  %s6 = scalar_select 0, %s5, %s3
  $region1: #{tpu_custom_call.1} parent=0
    #allocation3 [shape = 'u8[32768]{0}', space=vmem, size = 0x8000, scoped, tag = 'input window, operand 0']
    #allocation4 [shape = 's32[2]{0}', space=sflag, size = 0x8, scoped, tag = 'scoped memory for tpu_custom_call.1']
    #allocation5 [shape = 's32[2]{0}', space=sflag, size = 0x8, scoped, tag = 'scoped memory for tpu_custom_call.1']
    #allocation6 [shape = 'u8[315392]{0}', space=vmem, size = 0x4d000, scoped, tag = 'input window, operand 1, single buffered']
    #allocation7 [shape = 's32[1]{0}', space=sflag, size = 0x4, scoped, tag = 'scoped memory for tpu_custom_call.1']
    #allocation8 [shape = 'u8[4096]{0}', space=vmem, size = 0x1000, scoped, tag = 'output window, operand 0']
    %7 = vsyncpa [#allocation4], 0
    %s8 = scalar_lea.sflag [#allocation4], 1
    %9 = vsyncpa %s8, 0
    %10 = vsyncpa [#allocation7], 0
    %11 = vsyncpa [#allocation5], 0
    %s12 = scalar_lea.sflag [#allocation5], 1
    %13 = vsyncpa %s12, 0
    loop: start=0, step=1, limit=6
    $region2: #{tpu_custom_call.1} parent=1 // loop_pre_header
      _
    $region3: #{tpu_custom_call.1} parent=1 // loop_header
      %s15 = sphi 0, %s19
      %p16 = scmp.ge.s32.totalorder %s15, 6
      %s22 = sphi 0, %s34
      %s23 = sphi 0, %s30
      %s24 = sphi 0, %s22
      %s25 = sphi 0, %s23
      %s26 = sphi 0, %s24
      %s27 = sphi 0, %s25
      %s39 = sphi 0, %s41
      %s42 = sphi 0, %s39
      %s43 = sphi 0, %s42
      %s59 = sphi 0, %s43
      %s63 = sphi 0, %s63
      %s65 = sphi 0, %s63
      %s66 = sphi 0, %s65
      %s80 = sphi 0, %s66
      %s88 = sphi 0, %s90
      %s91 = sphi 0, %s88
      %s92 = sphi 0, %s91
      %s108 = sphi 0, %s92
    $region4: #{tpu_custom_call.1} parent=1 // loop_header_branch
      %18 = sbr.rel (%p16) target = $region8
    $region5: #{tpu_custom_call.1} parent=1 // loop_body
      %s20 = ssub.s32 %s15, 1
      %s21 = ssub.s32 %s15, 2
      %s28 = sadd.s32 1, %s23
      %p29 = scmp.ge.s32.totalorder %s28, 2
      %s30 = scalar_select %p29, 0, %s28
      %s31 = sadd.s32 1, %s22
      %s32 = scalar_select %p29, %s31, %s22
      %p33 = scmp.ge.s32.totalorder %s32, 2
      %s34 = scalar_select %p33, 0, %s32
      %s35 = ssub.s32 %s22, %s34
      %s36 = ssub.s32 %s23, %s30
      %s37 = sor.u32 %s35, %s36
      %p38 = scmp.eq.s32.totalorder %s37, 0
      %s40 = sadd.s32 %s39, 1
      %s41 = scalar_select %p38, %s39, %s40
      %p44 = pneg %p38
      %p45 = scmp.eq.s32.totalorder %s15, 3
      %p46 = por %p44, %p45
      %p47 = scmp.ne.s32.totalorder %s39, %s42
      %p48 = scmp.eq.s32.totalorder %s15, 0
      %p49 = por %p47, %p48
      %p50 = scmp.ne.s32.totalorder %s39, %s42
      %p51 = scmp.eq.s32.totalorder %s20, 3
      %p52 = por %p50, %p51
      %p53 = scmp.ne.s32.totalorder %s42, %s43
      %p54 = scmp.eq.s32.totalorder %s20, 0
      %p55 = por %p53, %p54
      %p56 = scmp.ne.s32.totalorder %s42, %s43
      %p57 = scmp.eq.s32.totalorder %s21, 3
      %p58 = por %p56, %p57
      %p60 = scmp.ne.s32.totalorder %s43, %s59
      %p61 = scmp.eq.s32.totalorder %s21, 0
      %p62 = por %p60, %p61
      %s64 = sadd.s32 %s63, 1
      %p67 = scmp.eq.s32.totalorder %s15, 3
      %p68 = scmp.ne.s32.totalorder %s63, %s65
      %p69 = scmp.eq.s32.totalorder %s15, 0
      %p70 = por %p68, %p69
      %p71 = scmp.ne.s32.totalorder %s63, %s65
      %p72 = scmp.eq.s32.totalorder %s20, 3
      %p73 = por %p71, %p72
      %p74 = scmp.ne.s32.totalorder %s65, %s66
      %p75 = scmp.eq.s32.totalorder %s20, 0
      %p76 = por %p74, %p75
      %p77 = scmp.ne.s32.totalorder %s65, %s66
      %p78 = scmp.eq.s32.totalorder %s21, 3
      %p79 = por %p77, %p78
      %p81 = scmp.ne.s32.totalorder %s66, %s80
      %p82 = scmp.eq.s32.totalorder %s21, 0
      %p83 = por %p81, %p82
      %s84 = ssub.s32 %s22, %s34
      %s85 = ssub.s32 %s23, %s30
      %s86 = sor.u32 %s84, %s85
      %p87 = scmp.eq.s32.totalorder %s86, 0
      %s89 = sadd.s32 %s88, 1
      %s90 = scalar_select %p87, %s88, %s89
      %p93 = pneg %p87
      %p94 = scmp.eq.s32.totalorder %s15, 3
      %p95 = por %p93, %p94
      %p96 = scmp.ne.s32.totalorder %s88, %s91
      %p97 = scmp.eq.s32.totalorder %s15, 0
      %p98 = por %p96, %p97
      %p99 = scmp.ne.s32.totalorder %s88, %s91
      %p100 = scmp.eq.s32.totalorder %s20, 3
      %p101 = por %p99, %p100
      %p102 = scmp.ne.s32.totalorder %s91, %s92
      %p103 = scmp.eq.s32.totalorder %s20, 0
      %p104 = por %p102, %p103
      %p105 = scmp.ne.s32.totalorder %s91, %s92
      %p106 = scmp.eq.s32.totalorder %s21, 3
      %p107 = por %p105, %p106
      %p109 = scmp.ne.s32.totalorder %s92, %s108
      %p110 = scmp.eq.s32.totalorder %s21, 0
      %p111 = por %p109, %p110
      %p112 = scmp.le.s32.totalorder 1, %s15
      %p113 = scmp.lt.s32.totalorder %s15, 5
      %p114 = pnand %p112, %p113
      %p115 = pneg %p114
      // Predicated region
      $region9: #{tpu_custom_call.1} parent=5 // pred_check
        _
      $region10: #{tpu_custom_call.1} parent=5 // pred_check_branch
        %117 = sbr.rel (%p114) target = $region12
      $region11: #{tpu_custom_call.1} parent=5 // pred_region
        %s118 = ssub.s32 %s15, 1
        // Predicated region
        $region13: #{tpu_custom_call.1} parent=11 // pred_check
          %p119 = pneg %p76
        $region14: #{tpu_custom_call.1} parent=11 // pred_check_branch
          %121 = sbr.rel (%p119) target = $region16
        $region15: #{tpu_custom_call.1} parent=11 // pred_region
          %s123 = ssub.s32 9856, 9856
          %124 = vsyncadd [#allocation7], %s123
          %s125 = sshll.u32 [#allocation6], 4
          %s126 = int_to_ptr.vmem [resolvable:$true] %s125
          %131 = dma.hbm_to_vmem [thread:$0]  %s1, 9856, %s126, [#allocation7], 128, 128, 8
        $region16: #{tpu_custom_call.1} parent=11 // pred_fallthru
          _
      $region12: #{tpu_custom_call.1} parent=5 // pred_fallthru
        _
      %p132 = scmp.lt.s32.totalorder %s15, 4
      // Predicated region
      $region17: #{tpu_custom_call.1} parent=5 // pred_check
        %p133 = pneg %p132
      $region18: #{tpu_custom_call.1} parent=5 // pred_check_branch
        %135 = sbr.rel (%p133) target = $region20
      $region19: #{tpu_custom_call.1} parent=5 // pred_region
        // Predicated region
        $region21: #{tpu_custom_call.1} parent=19 // pred_check
          %p136 = pneg %p49
        $region22: #{tpu_custom_call.1} parent=19 // pred_check_branch
          %138 = sbr.rel (%p136) target = $region24
        $region23: #{tpu_custom_call.1} parent=19 // pred_region
          %s139 = sand.u32 %s39, 1
          %s140 = scalar_lea.sflag [#allocation4], %s139
          %s141 = sand.u32 %s39, 1
          %s142 = smul.addr %s141, 32
          %s143 = scalar_lea.vmem [#allocation3], %s142
          %s145 = ssub.s32 512, 512
          %146 = vsyncadd %s140, %s145
          %s147 = smul.addr %s23, 4
          %s148 = smul.addr %s22, 8
          %s149 = sadd.s32 %s147, %s148
          %s150 = smul.addr %s149, 128
          %s151 = scalar_lea.hbm %s0, %s150
          %s152 = sshll.u32 %s143, 4
          %s153 = int_to_ptr.vmem [resolvable:$true] %s152
          %158 = dma.hbm_to_vmem [thread:$0]  %s151, 512, %s153, %s140, 128, 128, 8
        $region24: #{tpu_custom_call.1} parent=19 // pred_fallthru
          _
      $region20: #{tpu_custom_call.1} parent=5 // pred_fallthru
        _
      %p159 = scmp.le.s32.totalorder 1, %s15
      %p160 = scmp.lt.s32.totalorder %s15, 5
      %p161 = pnand %p159, %p160
      %p162 = pneg %p161
      // Predicated region
      $region25: #{tpu_custom_call.1} parent=5 // pred_check
        _
      $region26: #{tpu_custom_call.1} parent=5 // pred_check_branch
        %164 = sbr.rel (%p161) target = $region28
      $region27: #{tpu_custom_call.1} parent=5 // pred_region
        %s165 = ssub.s32 %s15, 1
        %s166 = sand.u32 %s42, 1
        %s167 = scalar_lea.sflag [#allocation4], %s166
        %s168 = sand.u32 %s42, 1
        %s169 = smul.addr %s168, 32
        %s170 = scalar_lea.vmem [#allocation3], %s169
        // Predicated region
        $region29: #{tpu_custom_call.1} parent=27 // pred_check
          %p171 = pneg %p55
        $region30: #{tpu_custom_call.1} parent=27 // pred_check_branch
          %173 = sbr.rel (%p171) target = $region32
        $region31: #{tpu_custom_call.1} parent=27 // pred_region
          %174 = dma.done %s167, 512
        $region32: #{tpu_custom_call.1} parent=27 // pred_fallthru
          _
        // Predicated region
        $region33: #{tpu_custom_call.1} parent=27 // pred_check
          %p175 = pneg %p76
        $region34: #{tpu_custom_call.1} parent=27 // pred_check_branch
          %177 = sbr.rel (%p175) target = $region36
        $region35: #{tpu_custom_call.1} parent=27 // pred_region
          %178 = dma.done [#allocation7], 9856
        $region36: #{tpu_custom_call.1} parent=27 // pred_fallthru
          _
        %s179 = sand.u32 %s42, 1
        %s180 = scalar_lea.sflag [#allocation4], %s179
        %s181 = sand.u32 %s42, 1
        %s182 = smul.addr %s181, 32
        %s183 = scalar_lea.vmem [#allocation3], %s182
        %p184 = pneg %p55
        %p185 = pneg %p52
        %p186 = pneg %p76
        %p187 = pneg %p73
        %p188 = pneg %p104
        %p189 = pneg %p101
        %s190 = sand.u32 %s91, 1
        %s191 = scalar_lea.sflag [#allocation5], %s190
        %s192 = sand.u32 %s91, 1
        %s193 = smul.addr %s192, 4
        %s194 = scalar_lea.vmem [#allocation8], %s193
        %s195 = smul.u32 %s25, 8
        %s196 = ssub.s32 %s195, 16
        %v197 = vlaneseq
        %v198 = vshrl.u32 %v197, 7
        %v199 = vadd.s32 %v198, 8
        %v200 = vadd.s32 %v198, 16
        %v201 = vadd.s32 %v198, 24
        %v202 = vstv %s196
        %v203 = vadd.s32 %v198, %v202
        %v204 = vadd.s32 %v199, %v202
        %v205 = vadd.s32 %v200, %v202
        %v206 = vadd.s32 %v201, %v202
        %vm207 = vcmp.ge.s32.totalorder %v203, 0
        %vm208 = vcmp.ge.s32.totalorder %v204, 0
        %vm209 = vcmp.ge.s32.totalorder %v205, 0
        %vm210 = vcmp.ge.s32.totalorder %v206, 0
        %vm211 = vcmp.lt.s32.totalorder %v203, 16
        %vm212 = vcmp.lt.s32.totalorder %v204, 16
        %vm213 = vcmp.lt.s32.totalorder %v205, 16
        %vm214 = vcmp.lt.s32.totalorder %v206, 16
        %vm215 = vmand %vm207, %vm211
        %vm216 = vmand %vm208, %vm212
        %vm217 = vmand %vm209, %vm213
        %vm218 = vmand %vm210, %vm214
        %vm219 = vcmask 392192
        %220 = vst.msk [vmem:[#allocation2] sm:$0xff] %vm219, 0.0
        %221 = vst.msk [vmem:[#allocation2 + $0x28] sm:$0xff] %vm219, 0.0
        %v222 = vld [vmem:[%s170] sm:$0xff]
        %v223 = vld [vmem:[%s170 + $0x8] sm:$0xff]
        %v224 = vld [vmem:[%s170 + $0x10] sm:$0xff]
        %v225 = vld [vmem:[%s170 + $0x18] sm:$0xff]
        %v226 = vld [vmem:[#allocation6] sm:$0xff]
        %v227 = vld [vmem:[#allocation6 + $0x8] sm:$0xff]
        %v228 = vld [vmem:[#allocation6 + $0x10] sm:$0xff]
        %v229 = vld [vmem:[#allocation6 + $0x18] sm:$0xff]
        %v230 = vld [vmem:[#allocation6 + $0x20] sm:$0xff]
        %v231 = vld [vmem:[#allocation6 + $0x28] sm:$0xff]
        %v232 = vld [vmem:[#allocation6 + $0x30] sm:$0xff]
        %v233 = vld [vmem:[#allocation6 + $0x38] sm:$0xf]
        %v234 = vld [vmem:[#allocation6 + $0x40] sm:$0x1]
        %v235 = vld [vmem:[#allocation6 + $0x48] sm:$0xff]
        %v236 = vld [vmem:[#allocation6 + $0x50] sm:$0xff]
        %v237 = vld [vmem:[#allocation6 + $0x58] sm:$0xff]
        %v238 = vld [vmem:[#allocation6 + $0x60] sm:$0xff]
        %v239 = vld [vmem:[#allocation6 + $0x68] sm:$0xff]
        %v240 = vld [vmem:[#allocation6 + $0x70] sm:$0xff]
        %v241 = vld [vmem:[#allocation6 + $0x78] sm:$0xff]
        %v242 = vld [vmem:[#allocation6 + $0x80] sm:$0xff]
        %v243 = vld [vmem:[#allocation6 + $0x88] sm:$0xff]
        %v244 = vld [vmem:[#allocation6 + $0x90] sm:$0xff]
        %v245 = vld [vmem:[#allocation6 + $0x98] sm:$0xff]
        %v246 = vld [vmem:[#allocation6 + $0xa0] sm:$0xff]
        %v247 = vld [vmem:[#allocation6 + $0xa8] sm:$0xf]
        %v248 = vld [vmem:[#allocation6 + $0xb0] sm:$0x1]
        %v249 = vlaneseq
        %v250 = vshrl.u32 %v249, 7
        %v251 = vsub.s32 0, %v250
        %v252 = vrot.slane %v234, %v251
        %vm253 = vcmask 490496
        %v255 = vsel %vm253, %v222, 0
        %v258 = vsel %vm253, %v223, 0
        %v261 = vsel %vm253, %v224, 0
        %v264 = vsel %vm253, %v225, 0
        %vm266 = vcmask 1043456
        %v268 = vsel %vm266, %v233, 0
        %270 = vmatprep.subr.mxu0 0.0
        %271 = vmatpush1.msra.mxu0 0.0
        %272 = vmatprep.subr.mxu0 0.0
        %273 = vmatpush1.msra.mxu0 0.0
        %274 = vmatprep.subr.mxu0 0.0
        %275 = vmatpush1.msra.mxu0 0.0
        %276 = vmatprep.subr.mxu0 0.0
        %277 = vmatpush1.msra.mxu0 0.0
        %278 = vmatprep.subr.mxu0 0.0
        %279 = vmatpush1.msra.mxu0 0.0
        %280 = vmatprep.subr.mxu0 0.0
        %281 = vmatpush1.msra.mxu0 0.0
        %282 = vmatprep.subr.mxu0 0.0
        %283 = vmatpush1.msra.mxu0 0.0
        %284 = vmatprep.subr.mxu0 0.0
        %285 = vmatpush1.msra.mxu0 0.0
        %286 = vmatprep.subr.mxu0 0.0
        %287 = vmatpush1.msra.mxu0 %v268
        %288 = vmatprep.subr.mxu0 0.0
        %289 = vmatpush1.msra.mxu0 %v232
        %290 = vmatprep.subr.mxu0 0.0
        %291 = vmatpush1.msra.mxu0 %v231
        %292 = vmatprep.subr.mxu0 0.0
        %293 = vmatpush1.msra.mxu0 %v230
        %294 = vmatprep.subr.mxu0 0.0
        %295 = vmatpush1.msra.mxu0 %v229
        %296 = vmatprep.subr.mxu0 0.0
        %297 = vmatpush1.msra.mxu0 %v228
        %298 = vmatprep.subr.mxu0 0.0
        %299 = vmatpush1.msra.mxu0 %v227
        %300 = vmatprep.subr.mxu0 0.0
        %301 = vmatpush1.msra.mxu0 %v226
        %302 = vmatprep.subr.mxu0 0.0
        %303 = vmatpush2.msra.mxu0 0.0
        %304 = vmatprep.subr.mxu0 0.0
        %305 = vmatpush2.msra.mxu0 0.0
        %306 = vmatprep.subr.mxu0 0.0
        %307 = vmatpush2.msra.mxu0 0.0
        %308 = vmatprep.subr.mxu0 0.0
        %309 = vmatpush2.msra.mxu0 0.0
        %310 = vmatprep.subr.mxu0 0.0
        %311 = vmatpush2.msra.mxu0 0.0
        %312 = vmatprep.subr.mxu0 0.0
        %313 = vmatpush2.msra.mxu0 0.0
        %314 = vmatprep.subr.mxu0 0.0
        %315 = vmatpush2.msra.mxu0 0.0
        %316 = vmatprep.subr.mxu0 0.0
        %317 = vmatpush2.msra.mxu0 0.0
        %318 = vmatprep.subr.mxu0 0.0
        %319 = vmatpush2.msra.mxu0 0.0
        %320 = vmatprep.subr.mxu0 0.0
        %321 = vmatpush2.msra.mxu0 0.0
        %322 = vmatprep.subr.mxu0 0.0
        %323 = vmatpush2.msra.mxu0 0.0
        %324 = vmatprep.subr.mxu0 0.0
        %325 = vmatpush2.msra.mxu0 0.0
        %326 = vmatprep.subr.mxu0 0.0
        %327 = vmatpush2.msra.mxu0 0.0
        %328 = vmatprep.subr.mxu0 0.0
        %329 = vmatpush2.msra.mxu0 0.0
        %330 = vmatprep.subr.mxu0 0.0
        %331 = vmatpush2.msra.mxu0 0.0
        %332 = vmatprep.subr.mxu0 0.0
        %333 = vmatpush2.msra.mxu0 0.0
        %334 = vmatprep.mubr.f32.mxu0 0.0
        %335 = vmatmul.mubr.f32.gmra.mxu0 %v255
        %v336 = vpop.f32.mrf.mxu0
        %v337 = vadd.f32 %v252, %v336
        %v338 = vpop.f32.mrf.mxu0
        %339 = vmatprep.mubr.f32.mxu0 0.0
        %340 = vmatmul.mubr.f32.gmra.mxu0 %v258
        %v341 = vpop.f32.mrf.mxu0
        %v342 = vadd.f32 %v252, %v341
        %v343 = vpop.f32.mrf.mxu0
        %344 = vmatprep.mubr.f32.mxu0 0.0
        %345 = vmatmul.mubr.f32.gmra.mxu0 %v261
        %v346 = vpop.f32.mrf.mxu0
        %v347 = vadd.f32 %v252, %v346
        %v348 = vpop.f32.mrf.mxu0
        %349 = vmatprep.mubr.f32.mxu0 0.0
        %350 = vmatmul.mubr.f32.gmra.mxu0 %v264
        %v351 = vpop.f32.mrf.mxu0
        %v352 = vadd.f32 %v252, %v351
        %v353 = vpop.f32.mrf.mxu0
        %354 = vdwg.mxu0
        %v355 = vmax.f32 %v337, 0.0
        %v356 = vmax.f32 %v342, 0.0
        %v357 = vmax.f32 %v347, 0.0
        %v358 = vmax.f32 %v352, 0.0
        %vm359 = vcmask 785408
        %v361 = vsel %vm359, %v355, 0
        %v364 = vsel %vm359, %v356, 0
        %v367 = vsel %vm359, %v357, 0
        %v370 = vsel %vm359, %v358, 0
        %372 = vmatprep.subr.mxu0 0.0
        %373 = vmatpush1.msra.mxu0 0.0
        %374 = vmatprep.subr.mxu0 0.0
        %375 = vmatpush1.msra.mxu0 0.0
        %376 = vmatprep.subr.mxu0 0.0
        %377 = vmatpush1.msra.mxu0 0.0
        %378 = vmatprep.subr.mxu0 0.0
        %379 = vmatpush1.msra.mxu0 0.0
        %380 = vmatprep.subr.mxu0 0.0
        %381 = vmatpush1.msra.mxu0 %v246
        %382 = vmatprep.subr.mxu0 0.0
        %383 = vmatpush1.msra.mxu0 %v245
        %384 = vmatprep.subr.mxu0 0.0
        %385 = vmatpush1.msra.mxu0 %v244
        %386 = vmatprep.subr.mxu0 0.0
        %387 = vmatpush1.msra.mxu0 %v243
        %388 = vmatprep.subr.mxu0 0.0
        %389 = vmatpush1.msra.mxu0 %v242
        %390 = vmatprep.subr.mxu0 0.0
        %391 = vmatpush1.msra.mxu0 %v241
        %392 = vmatprep.subr.mxu0 0.0
        %393 = vmatpush1.msra.mxu0 %v240
        %394 = vmatprep.subr.mxu0 0.0
        %395 = vmatpush1.msra.mxu0 %v239
        %396 = vmatprep.subr.mxu0 0.0
        %397 = vmatpush1.msra.mxu0 %v238
        %398 = vmatprep.subr.mxu0 0.0
        %399 = vmatpush1.msra.mxu0 %v237
        %400 = vmatprep.subr.mxu0 0.0
        %401 = vmatpush1.msra.mxu0 %v236
        %402 = vmatprep.subr.mxu0 0.0
        %403 = vmatpush1.msra.mxu0 %v235
        %404 = vmatprep.subr.mxu0 0.0
        %405 = vmatpush2.msra.mxu0 0.0
        %406 = vmatprep.subr.mxu0 0.0
        %407 = vmatpush2.msra.mxu0 0.0
        %408 = vmatprep.subr.mxu0 0.0
        %409 = vmatpush2.msra.mxu0 0.0
        %410 = vmatprep.subr.mxu0 0.0
        %411 = vmatpush2.msra.mxu0 0.0
        %412 = vmatprep.subr.mxu0 0.0
        %413 = vmatpush2.msra.mxu0 0.0
        %414 = vmatprep.subr.mxu0 0.0
        %415 = vmatpush2.msra.mxu0 0.0
        %416 = vmatprep.subr.mxu0 0.0
        %417 = vmatpush2.msra.mxu0 0.0
        %418 = vmatprep.subr.mxu0 0.0
        %419 = vmatpush2.msra.mxu0 0.0
        %420 = vmatprep.subr.mxu0 0.0
        %421 = vmatpush2.msra.mxu0 0.0
        %422 = vmatprep.subr.mxu0 0.0
        %423 = vmatpush2.msra.mxu0 0.0
        %424 = vmatprep.subr.mxu0 0.0
        %425 = vmatpush2.msra.mxu0 0.0
        %426 = vmatprep.subr.mxu0 0.0
        %427 = vmatpush2.msra.mxu0 0.0
        %428 = vmatprep.subr.mxu0 0.0
        %429 = vmatpush2.msra.mxu0 0.0
        %430 = vmatprep.subr.mxu0 0.0
        %431 = vmatpush2.msra.mxu0 0.0
        %432 = vmatprep.subr.mxu0 0.0
        %433 = vmatpush2.msra.mxu0 0.0
        %434 = vmatprep.subr.mxu0 0.0
        %435 = vmatpush2.msra.mxu0 0.0
        %436 = vmatprep.mubr.f32.mxu0 0.0
        %437 = vmatmul.mubr.f32.gmra.mxu0 %v361
        %v438 = vpop.f32.mrf.mxu0
        %v439 = vadd.f32 0.0, %v438
        %v440 = vpop.f32.mrf.mxu0
        %441 = vmatprep.mubr.f32.mxu0 0.0
        %442 = vmatmul.mubr.f32.gmra.mxu0 %v364
        %v443 = vpop.f32.mrf.mxu0
        %v444 = vadd.f32 0.0, %v443
        %v445 = vpop.f32.mrf.mxu0
        %446 = vmatprep.mubr.f32.mxu0 0.0
        %447 = vmatmul.mubr.f32.gmra.mxu0 %v367
        %v448 = vpop.f32.mrf.mxu0
        %v449 = vadd.f32 0.0, %v448
        %v450 = vpop.f32.mrf.mxu0
        %451 = vmatprep.mubr.f32.mxu0 0.0
        %452 = vmatmul.mubr.f32.gmra.mxu0 %v370
        %v453 = vpop.f32.mrf.mxu0
        %v454 = vadd.f32 0.0, %v453
        %v455 = vpop.f32.mrf.mxu0
        %456 = vdwg.mxu0
        %v457 = vsel %vm215, 1, 0
        %v458 = vsel %vm216, 1, 0
        %v459 = vsel %vm217, 1, 0
        %v460 = vsel %vm218, 1, 0
        %vm461 = vcmp.eq.s32.totalorder %v457, 1
        %vm462 = vcmp.eq.s32.totalorder %v458, 1
        %vm463 = vcmp.eq.s32.totalorder %v459, 1
        %vm464 = vcmp.eq.s32.totalorder %v460, 1
        %v465 = vsel %vm461, %v439, 0.0
        %v466 = vsel %vm462, %v444, 0.0
        %v467 = vsel %vm463, %v449, 0.0
        %v468 = vsel %vm464, %v454, 0.0
        %469 = vst.msk [vmem:[#allocation2 + $0x8] sm:$0xff] %vm219, %v465
        %470 = vst.msk [vmem:[#allocation2 + $0x10] sm:$0xff] %vm219, %v466
        %471 = vst.msk [vmem:[#allocation2 + $0x18] sm:$0xff] %vm219, %v467
        %472 = vst.msk [vmem:[#allocation2 + $0x20] sm:$0xff] %vm219, %v468
        %v473 = vld [vmem:[#allocation2 + $0x5] sm:$0xff]
        %v474 = vld [vmem:[#allocation2 + $0xd] sm:$0xff]
        %v475 = vld [vmem:[#allocation2 + $0x15] sm:$0xff]
        %v476 = vld [vmem:[#allocation2 + $0x1d] sm:$0xff]
        %v477 = vlaneseq
        %v478 = vshrl.u32 %v477, 7
        %v479 = vsub.s32 0, %v478
        %v480 = vrot.slane %v247, %v479
        %v481 = vmul.f32 %v480, %v473
        %v482 = vmul.f32 %v480, %v474
        %v483 = vmul.f32 %v480, %v475
        %v484 = vmul.f32 %v480, %v476
        %v485 = vadd.f32 %v439, %v481
        %v486 = vadd.f32 %v444, %v482
        %v487 = vadd.f32 %v449, %v483
        %v488 = vadd.f32 %v454, %v484
        %v489 = vld [vmem:[#allocation2 + $0x6] sm:$0xff]
        %v490 = vld [vmem:[#allocation2 + $0xe] sm:$0xff]
        %v491 = vld [vmem:[#allocation2 + $0x16] sm:$0xff]
        %v492 = vld [vmem:[#allocation2 + $0x1e] sm:$0xff]
        %v493 = vlaneseq
        %v494 = vshrl.u32 %v493, 7
        %v495 = vsub.s32 1, %v494
        %v496 = vrot.slane %v247, %v495
        %v497 = vmul.f32 %v496, %v489
        %v498 = vmul.f32 %v496, %v490
        %v499 = vmul.f32 %v496, %v491
        %v500 = vmul.f32 %v496, %v492
        %v501 = vadd.f32 %v485, %v497
        %v502 = vadd.f32 %v486, %v498
        %v503 = vadd.f32 %v487, %v499
        %v504 = vadd.f32 %v488, %v500
        %v505 = vld [vmem:[#allocation2 + $0x7] sm:$0xff]
        %v506 = vld [vmem:[#allocation2 + $0xf] sm:$0xff]
        %v507 = vld [vmem:[#allocation2 + $0x17] sm:$0xff]
        %v508 = vld [vmem:[#allocation2 + $0x1f] sm:$0xff]
        %v509 = vlaneseq
        %v510 = vshrl.u32 %v509, 7
        %v511 = vsub.s32 2, %v510
        %v512 = vrot.slane %v247, %v511
        %v513 = vmul.f32 %v512, %v505
        %v514 = vmul.f32 %v512, %v506
        %v515 = vmul.f32 %v512, %v507
        %v516 = vmul.f32 %v512, %v508
        %v517 = vadd.f32 %v501, %v513
        %v518 = vadd.f32 %v502, %v514
        %v519 = vadd.f32 %v503, %v515
        %v520 = vadd.f32 %v504, %v516
        %v521 = vld [vmem:[#allocation2 + $0x8] sm:$0xff]
        %v522 = vld [vmem:[#allocation2 + $0x10] sm:$0xff]
        %v523 = vld [vmem:[#allocation2 + $0x18] sm:$0xff]
        %v524 = vld [vmem:[#allocation2 + $0x20] sm:$0xff]
        %v525 = vlaneseq
        %v526 = vshrl.u32 %v525, 7
        %v527 = vsub.s32 3, %v526
        %v528 = vrot.slane %v247, %v527
        %v529 = vmul.f32 %v528, %v521
        %v530 = vmul.f32 %v528, %v522
        %v531 = vmul.f32 %v528, %v523
        %v532 = vmul.f32 %v528, %v524
        %v533 = vadd.f32 %v517, %v529
        %v534 = vadd.f32 %v518, %v530
        %v535 = vadd.f32 %v519, %v531
        %v536 = vadd.f32 %v520, %v532
        %v537 = vld [vmem:[#allocation2 + $0x9] sm:$0xff]
        %v538 = vld [vmem:[#allocation2 + $0x11] sm:$0xff]
        %v539 = vld [vmem:[#allocation2 + $0x19] sm:$0xff]
        %v540 = vld [vmem:[#allocation2 + $0x21] sm:$0xff]
        %v541 = vlaneseq
        %v542 = vshrl.u32 %v541, 7
        %v543 = vsub.s32 0, %v542
        %v544 = vrot.slane %v248, %v543
        %v545 = vmul.f32 %v544, %v537
        %v546 = vmul.f32 %v544, %v538
        %v547 = vmul.f32 %v544, %v539
        %v548 = vmul.f32 %v544, %v540
        %v549 = vadd.f32 %v533, %v545
        %v550 = vadd.f32 %v534, %v546
        %v551 = vadd.f32 %v535, %v547
        %v552 = vadd.f32 %v536, %v548
        %v553 = vld [vmem:[#allocation6 + $0xb8] sm:$0xff]
        %v554 = vld [vmem:[#allocation6 + $0xc0] sm:$0xff]
        %v555 = vld [vmem:[#allocation6 + $0xc8] sm:$0xff]
        %v556 = vld [vmem:[#allocation6 + $0xd0] sm:$0xff]
        %v557 = vld [vmem:[#allocation6 + $0xd8] sm:$0xff]
        %v558 = vld [vmem:[#allocation6 + $0xe0] sm:$0xff]
        %v559 = vld [vmem:[#allocation6 + $0xe8] sm:$0x1]
        %v560 = vld [vmem:[#allocation6 + $0xf0] sm:$0xff]
        %v561 = vld [vmem:[#allocation6 + $0xf8] sm:$0xff]
        %v562 = vld [vmem:[#allocation6 + $0x100] sm:$0xff]
        %v563 = vld [vmem:[#allocation6 + $0x108] sm:$0xff]
        %v564 = vld [vmem:[#allocation6 + $0x110] sm:$0xff]
        %v565 = vld [vmem:[#allocation6 + $0x118] sm:$0xff]
        %v566 = vld [vmem:[#allocation6 + $0x120] sm:$0xff]
        %v567 = vld [vmem:[#allocation6 + $0x128] sm:$0xff]
        %v568 = vld [vmem:[#allocation6 + $0x130] sm:$0xff]
        %v569 = vld [vmem:[#allocation6 + $0x138] sm:$0xff]
        %v570 = vld [vmem:[#allocation6 + $0x140] sm:$0xff]
        %v571 = vld [vmem:[#allocation6 + $0x148] sm:$0xff]
        %v572 = vld [vmem:[#allocation6 + $0x150] sm:$0xf]
        %v573 = vld [vmem:[#allocation6 + $0x158] sm:$0x1]
        %v574 = vlaneseq
        %v575 = vshrl.u32 %v574, 7
        %v576 = vsub.s32 0, %v575
        %v577 = vrot.slane %v559, %v576
        %v579 = vsel %vm219, %v549, 0
        %v582 = vsel %vm219, %v550, 0
        %v585 = vsel %vm219, %v551, 0
        %v588 = vsel %vm219, %v552, 0
        %590 = vmatprep.subr.mxu0 0.0
        %591 = vmatpush1.msra.mxu0 0.0
        %592 = vmatprep.subr.mxu0 0.0
        %593 = vmatpush1.msra.mxu0 0.0
        %594 = vmatprep.subr.mxu0 0.0
        %595 = vmatpush1.msra.mxu0 0.0
        %596 = vmatprep.subr.mxu0 0.0
        %597 = vmatpush1.msra.mxu0 0.0
        %598 = vmatprep.subr.mxu0 0.0
        %599 = vmatpush1.msra.mxu0 0.0
        %600 = vmatprep.subr.mxu0 0.0
        %601 = vmatpush1.msra.mxu0 0.0
        %602 = vmatprep.subr.mxu0 0.0
        %603 = vmatpush1.msra.mxu0 0.0
        %604 = vmatprep.subr.mxu0 0.0
        %605 = vmatpush1.msra.mxu0 0.0
        %606 = vmatprep.subr.mxu0 0.0
        %607 = vmatpush1.msra.mxu0 0.0
        %608 = vmatprep.subr.mxu0 0.0
        %609 = vmatpush1.msra.mxu0 0.0
        %610 = vmatprep.subr.mxu0 0.0
        %611 = vmatpush1.msra.mxu0 %v558
        %612 = vmatprep.subr.mxu0 0.0
        %613 = vmatpush1.msra.mxu0 %v557
        %614 = vmatprep.subr.mxu0 0.0
        %615 = vmatpush1.msra.mxu0 %v556
        %616 = vmatprep.subr.mxu0 0.0
        %617 = vmatpush1.msra.mxu0 %v555
        %618 = vmatprep.subr.mxu0 0.0
        %619 = vmatpush1.msra.mxu0 %v554
        %620 = vmatprep.subr.mxu0 0.0
        %621 = vmatpush1.msra.mxu0 %v553
        %622 = vmatprep.subr.mxu0 0.0
        %623 = vmatpush2.msra.mxu0 0.0
        %624 = vmatprep.subr.mxu0 0.0
        %625 = vmatpush2.msra.mxu0 0.0
        %626 = vmatprep.subr.mxu0 0.0
        %627 = vmatpush2.msra.mxu0 0.0
        %628 = vmatprep.subr.mxu0 0.0
        %629 = vmatpush2.msra.mxu0 0.0
        %630 = vmatprep.subr.mxu0 0.0
        %631 = vmatpush2.msra.mxu0 0.0
        %632 = vmatprep.subr.mxu0 0.0
        %633 = vmatpush2.msra.mxu0 0.0
        %634 = vmatprep.subr.mxu0 0.0
        %635 = vmatpush2.msra.mxu0 0.0
        %636 = vmatprep.subr.mxu0 0.0
        %637 = vmatpush2.msra.mxu0 0.0
        %638 = vmatprep.subr.mxu0 0.0
        %639 = vmatpush2.msra.mxu0 0.0
        %640 = vmatprep.subr.mxu0 0.0
        %641 = vmatpush2.msra.mxu0 0.0
        %642 = vmatprep.subr.mxu0 0.0
        %643 = vmatpush2.msra.mxu0 0.0
        %644 = vmatprep.subr.mxu0 0.0
        %645 = vmatpush2.msra.mxu0 0.0
        %646 = vmatprep.subr.mxu0 0.0
        %647 = vmatpush2.msra.mxu0 0.0
        %648 = vmatprep.subr.mxu0 0.0
        %649 = vmatpush2.msra.mxu0 0.0
        %650 = vmatprep.subr.mxu0 0.0
        %651 = vmatpush2.msra.mxu0 0.0
        %652 = vmatprep.subr.mxu0 0.0
        %653 = vmatpush2.msra.mxu0 0.0
        %654 = vmatprep.mubr.f32.mxu0 0.0
        %655 = vmatmul.mubr.f32.gmra.mxu0 %v579
        %v656 = vpop.f32.mrf.mxu0
        %v657 = vadd.f32 %v577, %v656
        %v658 = vpop.f32.mrf.mxu0
        %659 = vmatprep.mubr.f32.mxu0 0.0
        %660 = vmatmul.mubr.f32.gmra.mxu0 %v582
        %v661 = vpop.f32.mrf.mxu0
        %v662 = vadd.f32 %v577, %v661
        %v663 = vpop.f32.mrf.mxu0
        %664 = vmatprep.mubr.f32.mxu0 0.0
        %665 = vmatmul.mubr.f32.gmra.mxu0 %v585
        %v666 = vpop.f32.mrf.mxu0
        %v667 = vadd.f32 %v577, %v666
        %v668 = vpop.f32.mrf.mxu0
        %669 = vmatprep.mubr.f32.mxu0 0.0
        %670 = vmatmul.mubr.f32.gmra.mxu0 %v588
        %v671 = vpop.f32.mrf.mxu0
        %v672 = vadd.f32 %v577, %v671
        %v673 = vpop.f32.mrf.mxu0
        %674 = vdwg.mxu0
        %v675 = vmax.f32 %v657, 0.0
        %v676 = vmax.f32 %v662, 0.0
        %v677 = vmax.f32 %v667, 0.0
        %v678 = vmax.f32 %v672, 0.0
        %v680 = vsel %vm359, %v675, 0
        %v683 = vsel %vm359, %v676, 0
        %v686 = vsel %vm359, %v677, 0
        %v689 = vsel %vm359, %v678, 0
        %691 = vmatprep.subr.mxu0 0.0
        %692 = vmatpush1.msra.mxu0 0.0
        %693 = vmatprep.subr.mxu0 0.0
        %694 = vmatpush1.msra.mxu0 0.0
        %695 = vmatprep.subr.mxu0 0.0
        %696 = vmatpush1.msra.mxu0 0.0
        %697 = vmatprep.subr.mxu0 0.0
        %698 = vmatpush1.msra.mxu0 0.0
        %699 = vmatprep.subr.mxu0 0.0
        %700 = vmatpush1.msra.mxu0 %v571
        %701 = vmatprep.subr.mxu0 0.0
        %702 = vmatpush1.msra.mxu0 %v570
        %703 = vmatprep.subr.mxu0 0.0
        %704 = vmatpush1.msra.mxu0 %v569
        %705 = vmatprep.subr.mxu0 0.0
        %706 = vmatpush1.msra.mxu0 %v568
        %707 = vmatprep.subr.mxu0 0.0
        %708 = vmatpush1.msra.mxu0 %v567
        %709 = vmatprep.subr.mxu0 0.0
        %710 = vmatpush1.msra.mxu0 %v566
        %711 = vmatprep.subr.mxu0 0.0
        %712 = vmatpush1.msra.mxu0 %v565
        %713 = vmatprep.subr.mxu0 0.0
        %714 = vmatpush1.msra.mxu0 %v564
        %715 = vmatprep.subr.mxu0 0.0
        %716 = vmatpush1.msra.mxu0 %v563
        %717 = vmatprep.subr.mxu0 0.0
        %718 = vmatpush1.msra.mxu0 %v562
        %719 = vmatprep.subr.mxu0 0.0
        %720 = vmatpush1.msra.mxu0 %v561
        %721 = vmatprep.subr.mxu0 0.0
        %722 = vmatpush1.msra.mxu0 %v560
        %723 = vmatprep.subr.mxu0 0.0
        %724 = vmatpush2.msra.mxu0 0.0
        %725 = vmatprep.subr.mxu0 0.0
        %726 = vmatpush2.msra.mxu0 0.0
        %727 = vmatprep.subr.mxu0 0.0
        %728 = vmatpush2.msra.mxu0 0.0
        %729 = vmatprep.subr.mxu0 0.0
        %730 = vmatpush2.msra.mxu0 0.0
        %731 = vmatprep.subr.mxu0 0.0
        %732 = vmatpush2.msra.mxu0 0.0
        %733 = vmatprep.subr.mxu0 0.0
        %734 = vmatpush2.msra.mxu0 0.0
        %735 = vmatprep.subr.mxu0 0.0
        %736 = vmatpush2.msra.mxu0 0.0
        %737 = vmatprep.subr.mxu0 0.0
        %738 = vmatpush2.msra.mxu0 0.0
        %739 = vmatprep.subr.mxu0 0.0
        %740 = vmatpush2.msra.mxu0 0.0
        %741 = vmatprep.subr.mxu0 0.0
        %742 = vmatpush2.msra.mxu0 0.0
        %743 = vmatprep.subr.mxu0 0.0
        %744 = vmatpush2.msra.mxu0 0.0
        %745 = vmatprep.subr.mxu0 0.0
        %746 = vmatpush2.msra.mxu0 0.0
        %747 = vmatprep.subr.mxu0 0.0
        %748 = vmatpush2.msra.mxu0 0.0
        %749 = vmatprep.subr.mxu0 0.0
        %750 = vmatpush2.msra.mxu0 0.0
        %751 = vmatprep.subr.mxu0 0.0
        %752 = vmatpush2.msra.mxu0 0.0
        %753 = vmatprep.subr.mxu0 0.0
        %754 = vmatpush2.msra.mxu0 0.0
        %755 = vmatprep.mubr.f32.mxu0 0.0
        %756 = vmatmul.mubr.f32.gmra.mxu0 %v680
        %v757 = vpop.f32.mrf.mxu0
        %v758 = vadd.f32 0.0, %v757
        %v759 = vpop.f32.mrf.mxu0
        %760 = vmatprep.mubr.f32.mxu0 0.0
        %761 = vmatmul.mubr.f32.gmra.mxu0 %v683
        %v762 = vpop.f32.mrf.mxu0
        %v763 = vadd.f32 0.0, %v762
        %v764 = vpop.f32.mrf.mxu0
        %765 = vmatprep.mubr.f32.mxu0 0.0
        %766 = vmatmul.mubr.f32.gmra.mxu0 %v686
        %v767 = vpop.f32.mrf.mxu0
        %v768 = vadd.f32 0.0, %v767
        %v769 = vpop.f32.mrf.mxu0
        %770 = vmatprep.mubr.f32.mxu0 0.0
        %771 = vmatmul.mubr.f32.gmra.mxu0 %v689
        %v772 = vpop.f32.mrf.mxu0
        %v773 = vadd.f32 0.0, %v772
        %v774 = vpop.f32.mrf.mxu0
        %775 = vdwg.mxu0
        %v776 = vsel %vm461, %v758, 0.0
        %v777 = vsel %vm462, %v763, 0.0
        %v778 = vsel %vm463, %v768, 0.0
        %v779 = vsel %vm464, %v773, 0.0
        %780 = vst.msk [vmem:[#allocation2 + $0x8] sm:$0xff] %vm219, %v776
        %781 = vst.msk [vmem:[#allocation2 + $0x10] sm:$0xff] %vm219, %v777
        %782 = vst.msk [vmem:[#allocation2 + $0x18] sm:$0xff] %vm219, %v778
        %783 = vst.msk [vmem:[#allocation2 + $0x20] sm:$0xff] %vm219, %v779
        %v784 = vld [vmem:[#allocation2 + $0x5] sm:$0xff]
        %v785 = vld [vmem:[#allocation2 + $0xd] sm:$0xff]
        %v786 = vld [vmem:[#allocation2 + $0x15] sm:$0xff]
        %v787 = vld [vmem:[#allocation2 + $0x1d] sm:$0xff]
        %v788 = vlaneseq
        %v789 = vshrl.u32 %v788, 7
        %v790 = vsub.s32 0, %v789
        %v791 = vrot.slane %v572, %v790
        %v792 = vmul.f32 %v791, %v784
        %v793 = vmul.f32 %v791, %v785
        %v794 = vmul.f32 %v791, %v786
        %v795 = vmul.f32 %v791, %v787
        %v796 = vadd.f32 %v758, %v792
        %v797 = vadd.f32 %v763, %v793
        %v798 = vadd.f32 %v768, %v794
        %v799 = vadd.f32 %v773, %v795
        %v800 = vld [vmem:[#allocation2 + $0x6] sm:$0xff]
        %v801 = vld [vmem:[#allocation2 + $0xe] sm:$0xff]
        %v802 = vld [vmem:[#allocation2 + $0x16] sm:$0xff]
        %v803 = vld [vmem:[#allocation2 + $0x1e] sm:$0xff]
        %v804 = vlaneseq
        %v805 = vshrl.u32 %v804, 7
        %v806 = vsub.s32 1, %v805
        %v807 = vrot.slane %v572, %v806
        %v808 = vmul.f32 %v807, %v800
        %v809 = vmul.f32 %v807, %v801
        %v810 = vmul.f32 %v807, %v802
        %v811 = vmul.f32 %v807, %v803
        %v812 = vadd.f32 %v796, %v808
        %v813 = vadd.f32 %v797, %v809
        %v814 = vadd.f32 %v798, %v810
        %v815 = vadd.f32 %v799, %v811
        %v816 = vld [vmem:[#allocation2 + $0x7] sm:$0xff]
        %v817 = vld [vmem:[#allocation2 + $0xf] sm:$0xff]
        %v818 = vld [vmem:[#allocation2 + $0x17] sm:$0xff]
        %v819 = vld [vmem:[#allocation2 + $0x1f] sm:$0xff]
        %v820 = vlaneseq
        %v821 = vshrl.u32 %v820, 7
        %v822 = vsub.s32 2, %v821
        %v823 = vrot.slane %v572, %v822
        %v824 = vmul.f32 %v823, %v816
        %v825 = vmul.f32 %v823, %v817
        %v826 = vmul.f32 %v823, %v818
        %v827 = vmul.f32 %v823, %v819
        %v828 = vadd.f32 %v812, %v824
        %v829 = vadd.f32 %v813, %v825
        %v830 = vadd.f32 %v814, %v826
        %v831 = vadd.f32 %v815, %v827
        %v832 = vld [vmem:[#allocation2 + $0x8] sm:$0xff]
        %v833 = vld [vmem:[#allocation2 + $0x10] sm:$0xff]
        %v834 = vld [vmem:[#allocation2 + $0x18] sm:$0xff]
        %v835 = vld [vmem:[#allocation2 + $0x20] sm:$0xff]
        %v836 = vlaneseq
        %v837 = vshrl.u32 %v836, 7
        %v838 = vsub.s32 3, %v837
        %v839 = vrot.slane %v572, %v838
        %v840 = vmul.f32 %v839, %v832
        %v841 = vmul.f32 %v839, %v833
        %v842 = vmul.f32 %v839, %v834
        %v843 = vmul.f32 %v839, %v835
        %v844 = vadd.f32 %v828, %v840
        %v845 = vadd.f32 %v829, %v841
        %v846 = vadd.f32 %v830, %v842
        %v847 = vadd.f32 %v831, %v843
        %v848 = vld [vmem:[#allocation2 + $0x9] sm:$0xff]
        %v849 = vld [vmem:[#allocation2 + $0x11] sm:$0xff]
        %v850 = vld [vmem:[#allocation2 + $0x19] sm:$0xff]
        %v851 = vld [vmem:[#allocation2 + $0x21] sm:$0xff]
        %v852 = vlaneseq
        %v853 = vshrl.u32 %v852, 7
        %v854 = vsub.s32 0, %v853
        %v855 = vrot.slane %v573, %v854
        %v856 = vmul.f32 %v855, %v848
        %v857 = vmul.f32 %v855, %v849
        %v858 = vmul.f32 %v855, %v850
        %v859 = vmul.f32 %v855, %v851
        %v860 = vadd.f32 %v844, %v856
        %v861 = vadd.f32 %v845, %v857
        %v862 = vadd.f32 %v846, %v858
        %v863 = vadd.f32 %v847, %v859
        %v864 = vadd.f32 %v549, %v860
        %v865 = vadd.f32 %v550, %v861
        %v866 = vadd.f32 %v551, %v862
        %v867 = vadd.f32 %v552, %v863
        %v868 = vld [vmem:[#allocation6 + $0x160] sm:$0xff]
        %v869 = vld [vmem:[#allocation6 + $0x168] sm:$0xff]
        %v870 = vld [vmem:[#allocation6 + $0x170] sm:$0xff]
        %v871 = vld [vmem:[#allocation6 + $0x178] sm:$0xff]
        %v872 = vld [vmem:[#allocation6 + $0x180] sm:$0xff]
        %v873 = vld [vmem:[#allocation6 + $0x188] sm:$0xff]
        %v874 = vld [vmem:[#allocation6 + $0x190] sm:$0x1]
        %v875 = vld [vmem:[#allocation6 + $0x198] sm:$0xff]
        %v876 = vld [vmem:[#allocation6 + $0x1a0] sm:$0xff]
        %v877 = vld [vmem:[#allocation6 + $0x1a8] sm:$0xff]
        %v878 = vld [vmem:[#allocation6 + $0x1b0] sm:$0xff]
        %v879 = vld [vmem:[#allocation6 + $0x1b8] sm:$0xff]
        %v880 = vld [vmem:[#allocation6 + $0x1c0] sm:$0xff]
        %v881 = vld [vmem:[#allocation6 + $0x1c8] sm:$0xff]
        %v882 = vld [vmem:[#allocation6 + $0x1d0] sm:$0xff]
        %v883 = vld [vmem:[#allocation6 + $0x1d8] sm:$0xff]
        %v884 = vld [vmem:[#allocation6 + $0x1e0] sm:$0xff]
        %v885 = vld [vmem:[#allocation6 + $0x1e8] sm:$0xff]
        %v886 = vld [vmem:[#allocation6 + $0x1f0] sm:$0xff]
        %v887 = vld [vmem:[#allocation6 + $0x1f8] sm:$0xf]
        %v888 = vld [vmem:[#allocation6 + $0x200] sm:$0x1]
        %v889 = vlaneseq
        %v890 = vshrl.u32 %v889, 7
        %v891 = vsub.s32 0, %v890
        %v892 = vrot.slane %v874, %v891
        %v894 = vsel %vm219, %v864, 0
        %v897 = vsel %vm219, %v865, 0
        %v900 = vsel %vm219, %v866, 0
        %v903 = vsel %vm219, %v867, 0
        %905 = vmatprep.subr.mxu0 0.0
        %906 = vmatpush1.msra.mxu0 0.0
        %907 = vmatprep.subr.mxu0 0.0
        %908 = vmatpush1.msra.mxu0 0.0
        %909 = vmatprep.subr.mxu0 0.0
        %910 = vmatpush1.msra.mxu0 0.0
        %911 = vmatprep.subr.mxu0 0.0
        %912 = vmatpush1.msra.mxu0 0.0
        %913 = vmatprep.subr.mxu0 0.0
        %914 = vmatpush1.msra.mxu0 0.0
        %915 = vmatprep.subr.mxu0 0.0
        %916 = vmatpush1.msra.mxu0 0.0
        %917 = vmatprep.subr.mxu0 0.0
        %918 = vmatpush1.msra.mxu0 0.0
        %919 = vmatprep.subr.mxu0 0.0
        %920 = vmatpush1.msra.mxu0 0.0
        %921 = vmatprep.subr.mxu0 0.0
        %922 = vmatpush1.msra.mxu0 0.0
        %923 = vmatprep.subr.mxu0 0.0
        %924 = vmatpush1.msra.mxu0 0.0
        %925 = vmatprep.subr.mxu0 0.0
        %926 = vmatpush1.msra.mxu0 %v873
        %927 = vmatprep.subr.mxu0 0.0
        %928 = vmatpush1.msra.mxu0 %v872
        %929 = vmatprep.subr.mxu0 0.0
        %930 = vmatpush1.msra.mxu0 %v871
        %931 = vmatprep.subr.mxu0 0.0
        %932 = vmatpush1.msra.mxu0 %v870
        %933 = vmatprep.subr.mxu0 0.0
        %934 = vmatpush1.msra.mxu0 %v869
        %935 = vmatprep.subr.mxu0 0.0
        %936 = vmatpush1.msra.mxu0 %v868
        %937 = vmatprep.subr.mxu0 0.0
        %938 = vmatpush2.msra.mxu0 0.0
        %939 = vmatprep.subr.mxu0 0.0
        %940 = vmatpush2.msra.mxu0 0.0
        %941 = vmatprep.subr.mxu0 0.0
        %942 = vmatpush2.msra.mxu0 0.0
        %943 = vmatprep.subr.mxu0 0.0
        %944 = vmatpush2.msra.mxu0 0.0
        %945 = vmatprep.subr.mxu0 0.0
        %946 = vmatpush2.msra.mxu0 0.0
        %947 = vmatprep.subr.mxu0 0.0
        %948 = vmatpush2.msra.mxu0 0.0
        %949 = vmatprep.subr.mxu0 0.0
        %950 = vmatpush2.msra.mxu0 0.0
        %951 = vmatprep.subr.mxu0 0.0
        %952 = vmatpush2.msra.mxu0 0.0
        %953 = vmatprep.subr.mxu0 0.0
        %954 = vmatpush2.msra.mxu0 0.0
        %955 = vmatprep.subr.mxu0 0.0
        %956 = vmatpush2.msra.mxu0 0.0
        %957 = vmatprep.subr.mxu0 0.0
        %958 = vmatpush2.msra.mxu0 0.0
        %959 = vmatprep.subr.mxu0 0.0
        %960 = vmatpush2.msra.mxu0 0.0
        %961 = vmatprep.subr.mxu0 0.0
        %962 = vmatpush2.msra.mxu0 0.0
        %963 = vmatprep.subr.mxu0 0.0
        %964 = vmatpush2.msra.mxu0 0.0
        %965 = vmatprep.subr.mxu0 0.0
        %966 = vmatpush2.msra.mxu0 0.0
        %967 = vmatprep.subr.mxu0 0.0
        %968 = vmatpush2.msra.mxu0 0.0
        %969 = vmatprep.mubr.f32.mxu0 0.0
        %970 = vmatmul.mubr.f32.gmra.mxu0 %v894
        %v971 = vpop.f32.mrf.mxu0
        %v972 = vadd.f32 %v892, %v971
        %v973 = vpop.f32.mrf.mxu0
        %974 = vmatprep.mubr.f32.mxu0 0.0
        %975 = vmatmul.mubr.f32.gmra.mxu0 %v897
        %v976 = vpop.f32.mrf.mxu0
        %v977 = vadd.f32 %v892, %v976
        %v978 = vpop.f32.mrf.mxu0
        %979 = vmatprep.mubr.f32.mxu0 0.0
        %980 = vmatmul.mubr.f32.gmra.mxu0 %v900
        %v981 = vpop.f32.mrf.mxu0
        %v982 = vadd.f32 %v892, %v981
        %v983 = vpop.f32.mrf.mxu0
        %984 = vmatprep.mubr.f32.mxu0 0.0
        %985 = vmatmul.mubr.f32.gmra.mxu0 %v903
        %v986 = vpop.f32.mrf.mxu0
        %v987 = vadd.f32 %v892, %v986
        %v988 = vpop.f32.mrf.mxu0
        %989 = vdwg.mxu0
        %v990 = vmax.f32 %v972, 0.0
        %v991 = vmax.f32 %v977, 0.0
        %v992 = vmax.f32 %v982, 0.0
        %v993 = vmax.f32 %v987, 0.0
        %v995 = vsel %vm359, %v990, 0
        %v998 = vsel %vm359, %v991, 0
        %v1001 = vsel %vm359, %v992, 0
        %v1004 = vsel %vm359, %v993, 0
        %1006 = vmatprep.subr.mxu0 0.0
        %1007 = vmatpush1.msra.mxu0 0.0
        %1008 = vmatprep.subr.mxu0 0.0
        %1009 = vmatpush1.msra.mxu0 0.0
        %1010 = vmatprep.subr.mxu0 0.0
        %1011 = vmatpush1.msra.mxu0 0.0
        %1012 = vmatprep.subr.mxu0 0.0
        %1013 = vmatpush1.msra.mxu0 0.0
        %1014 = vmatprep.subr.mxu0 0.0
        %1015 = vmatpush1.msra.mxu0 %v886
        %1016 = vmatprep.subr.mxu0 0.0
        %1017 = vmatpush1.msra.mxu0 %v885
        %1018 = vmatprep.subr.mxu0 0.0
        %1019 = vmatpush1.msra.mxu0 %v884
        %1020 = vmatprep.subr.mxu0 0.0
        %1021 = vmatpush1.msra.mxu0 %v883
        %1022 = vmatprep.subr.mxu0 0.0
        %1023 = vmatpush1.msra.mxu0 %v882
        %1024 = vmatprep.subr.mxu0 0.0
        %1025 = vmatpush1.msra.mxu0 %v881
        %1026 = vmatprep.subr.mxu0 0.0
        %1027 = vmatpush1.msra.mxu0 %v880
        %1028 = vmatprep.subr.mxu0 0.0
        %1029 = vmatpush1.msra.mxu0 %v879
        %1030 = vmatprep.subr.mxu0 0.0
        %1031 = vmatpush1.msra.mxu0 %v878
        %1032 = vmatprep.subr.mxu0 0.0
        %1033 = vmatpush1.msra.mxu0 %v877
        %1034 = vmatprep.subr.mxu0 0.0
        %1035 = vmatpush1.msra.mxu0 %v876
        %1036 = vmatprep.subr.mxu0 0.0
        %1037 = vmatpush1.msra.mxu0 %v875
        %1038 = vmatprep.subr.mxu0 0.0
        %1039 = vmatpush2.msra.mxu0 0.0
        %1040 = vmatprep.subr.mxu0 0.0
        %1041 = vmatpush2.msra.mxu0 0.0
        %1042 = vmatprep.subr.mxu0 0.0
        %1043 = vmatpush2.msra.mxu0 0.0
        %1044 = vmatprep.subr.mxu0 0.0
        %1045 = vmatpush2.msra.mxu0 0.0
        %1046 = vmatprep.subr.mxu0 0.0
        %1047 = vmatpush2.msra.mxu0 0.0
        %1048 = vmatprep.subr.mxu0 0.0
        %1049 = vmatpush2.msra.mxu0 0.0
        %1050 = vmatprep.subr.mxu0 0.0
        %1051 = vmatpush2.msra.mxu0 0.0
        %1052 = vmatprep.subr.mxu0 0.0
        %1053 = vmatpush2.msra.mxu0 0.0
        %1054 = vmatprep.subr.mxu0 0.0
        %1055 = vmatpush2.msra.mxu0 0.0
        %1056 = vmatprep.subr.mxu0 0.0
        %1057 = vmatpush2.msra.mxu0 0.0
        %1058 = vmatprep.subr.mxu0 0.0
        %1059 = vmatpush2.msra.mxu0 0.0
        %1060 = vmatprep.subr.mxu0 0.0
        %1061 = vmatpush2.msra.mxu0 0.0
        %1062 = vmatprep.subr.mxu0 0.0
        %1063 = vmatpush2.msra.mxu0 0.0
        %1064 = vmatprep.subr.mxu0 0.0
        %1065 = vmatpush2.msra.mxu0 0.0
        %1066 = vmatprep.subr.mxu0 0.0
        %1067 = vmatpush2.msra.mxu0 0.0
        %1068 = vmatprep.subr.mxu0 0.0
        %1069 = vmatpush2.msra.mxu0 0.0
        %1070 = vmatprep.mubr.f32.mxu0 0.0
        %1071 = vmatmul.mubr.f32.gmra.mxu0 %v995
        %v1072 = vpop.f32.mrf.mxu0
        %v1073 = vadd.f32 0.0, %v1072
        %v1074 = vpop.f32.mrf.mxu0
        %1075 = vmatprep.mubr.f32.mxu0 0.0
        %1076 = vmatmul.mubr.f32.gmra.mxu0 %v998
        %v1077 = vpop.f32.mrf.mxu0
        %v1078 = vadd.f32 0.0, %v1077
        %v1079 = vpop.f32.mrf.mxu0
        %1080 = vmatprep.mubr.f32.mxu0 0.0
        %1081 = vmatmul.mubr.f32.gmra.mxu0 %v1001
        %v1082 = vpop.f32.mrf.mxu0
        %v1083 = vadd.f32 0.0, %v1082
        %v1084 = vpop.f32.mrf.mxu0
        %1085 = vmatprep.mubr.f32.mxu0 0.0
        %1086 = vmatmul.mubr.f32.gmra.mxu0 %v1004
        %v1087 = vpop.f32.mrf.mxu0
        %v1088 = vadd.f32 0.0, %v1087
        %v1089 = vpop.f32.mrf.mxu0
        %1090 = vdwg.mxu0
        %v1091 = vsel %vm461, %v1073, 0.0
        %v1092 = vsel %vm462, %v1078, 0.0
        %v1093 = vsel %vm463, %v1083, 0.0
        %v1094 = vsel %vm464, %v1088, 0.0
        %1095 = vst.msk [vmem:[#allocation2 + $0x8] sm:$0xff] %vm219, %v1091
        %1096 = vst.msk [vmem:[#allocation2 + $0x10] sm:$0xff] %vm219, %v1092
        %1097 = vst.msk [vmem:[#allocation2 + $0x18] sm:$0xff] %vm219, %v1093
        %1098 = vst.msk [vmem:[#allocation2 + $0x20] sm:$0xff] %vm219, %v1094
        %v1099 = vld [vmem:[#allocation2 + $0x5] sm:$0xff]
        %v1100 = vld [vmem:[#allocation2 + $0xd] sm:$0xff]
        %v1101 = vld [vmem:[#allocation2 + $0x15] sm:$0xff]
        %v1102 = vld [vmem:[#allocation2 + $0x1d] sm:$0xff]
        %v1103 = vlaneseq
        %v1104 = vshrl.u32 %v1103, 7
        %v1105 = vsub.s32 0, %v1104
        %v1106 = vrot.slane %v887, %v1105
        %v1107 = vmul.f32 %v1106, %v1099
        %v1108 = vmul.f32 %v1106, %v1100
        %v1109 = vmul.f32 %v1106, %v1101
        %v1110 = vmul.f32 %v1106, %v1102
        %v1111 = vadd.f32 %v1073, %v1107
        %v1112 = vadd.f32 %v1078, %v1108
        %v1113 = vadd.f32 %v1083, %v1109
        %v1114 = vadd.f32 %v1088, %v1110
        %v1115 = vld [vmem:[#allocation2 + $0x6] sm:$0xff]
        %v1116 = vld [vmem:[#allocation2 + $0xe] sm:$0xff]
        %v1117 = vld [vmem:[#allocation2 + $0x16] sm:$0xff]
        %v1118 = vld [vmem:[#allocation2 + $0x1e] sm:$0xff]
        %v1119 = vlaneseq
        %v1120 = vshrl.u32 %v1119, 7
        %v1121 = vsub.s32 1, %v1120
        %v1122 = vrot.slane %v887, %v1121
        %v1123 = vmul.f32 %v1122, %v1115
        %v1124 = vmul.f32 %v1122, %v1116
        %v1125 = vmul.f32 %v1122, %v1117
        %v1126 = vmul.f32 %v1122, %v1118
        %v1127 = vadd.f32 %v1111, %v1123
        %v1128 = vadd.f32 %v1112, %v1124
        %v1129 = vadd.f32 %v1113, %v1125
        %v1130 = vadd.f32 %v1114, %v1126
        %v1131 = vld [vmem:[#allocation2 + $0x7] sm:$0xff]
        %v1132 = vld [vmem:[#allocation2 + $0xf] sm:$0xff]
        %v1133 = vld [vmem:[#allocation2 + $0x17] sm:$0xff]
        %v1134 = vld [vmem:[#allocation2 + $0x1f] sm:$0xff]
        %v1135 = vlaneseq
        %v1136 = vshrl.u32 %v1135, 7
        %v1137 = vsub.s32 2, %v1136
        %v1138 = vrot.slane %v887, %v1137
        %v1139 = vmul.f32 %v1138, %v1131
        %v1140 = vmul.f32 %v1138, %v1132
        %v1141 = vmul.f32 %v1138, %v1133
        %v1142 = vmul.f32 %v1138, %v1134
        %v1143 = vadd.f32 %v1127, %v1139
        %v1144 = vadd.f32 %v1128, %v1140
        %v1145 = vadd.f32 %v1129, %v1141
        %v1146 = vadd.f32 %v1130, %v1142
        %v1147 = vld [vmem:[#allocation2 + $0x8] sm:$0xff]
        %v1148 = vld [vmem:[#allocation2 + $0x10] sm:$0xff]
        %v1149 = vld [vmem:[#allocation2 + $0x18] sm:$0xff]
        %v1150 = vld [vmem:[#allocation2 + $0x20] sm:$0xff]
        %v1151 = vlaneseq
        %v1152 = vshrl.u32 %v1151, 7
        %v1153 = vsub.s32 3, %v1152
        %v1154 = vrot.slane %v887, %v1153
        %v1155 = vmul.f32 %v1154, %v1147
        %v1156 = vmul.f32 %v1154, %v1148
        %v1157 = vmul.f32 %v1154, %v1149
        %v1158 = vmul.f32 %v1154, %v1150
        %v1159 = vadd.f32 %v1143, %v1155
        %v1160 = vadd.f32 %v1144, %v1156
        %v1161 = vadd.f32 %v1145, %v1157
        %v1162 = vadd.f32 %v1146, %v1158
        %v1163 = vld [vmem:[#allocation2 + $0x9] sm:$0xff]
        %v1164 = vld [vmem:[#allocation2 + $0x11] sm:$0xff]
        %v1165 = vld [vmem:[#allocation2 + $0x19] sm:$0xff]
        %v1166 = vld [vmem:[#allocation2 + $0x21] sm:$0xff]
        %v1167 = vlaneseq
        %v1168 = vshrl.u32 %v1167, 7
        %v1169 = vsub.s32 0, %v1168
        %v1170 = vrot.slane %v888, %v1169
        %v1171 = vmul.f32 %v1170, %v1163
        %v1172 = vmul.f32 %v1170, %v1164
        %v1173 = vmul.f32 %v1170, %v1165
        %v1174 = vmul.f32 %v1170, %v1166
        %v1175 = vadd.f32 %v1159, %v1171
        %v1176 = vadd.f32 %v1160, %v1172
        %v1177 = vadd.f32 %v1161, %v1173
        %v1178 = vadd.f32 %v1162, %v1174
        %v1179 = vadd.f32 %v864, %v1175
        %v1180 = vadd.f32 %v865, %v1176
        %v1181 = vadd.f32 %v866, %v1177
        %v1182 = vadd.f32 %v867, %v1178
        %v1183 = vld [vmem:[#allocation6 + $0x208] sm:$0xff]
        %v1184 = vld [vmem:[#allocation6 + $0x210] sm:$0xff]
        %v1185 = vld [vmem:[#allocation6 + $0x218] sm:$0xff]
        %v1186 = vld [vmem:[#allocation6 + $0x220] sm:$0xff]
        %v1187 = vld [vmem:[#allocation6 + $0x228] sm:$0xff]
        %v1188 = vld [vmem:[#allocation6 + $0x230] sm:$0xff]
        %v1189 = vld [vmem:[#allocation6 + $0x238] sm:$0x1]
        %v1190 = vlaneseq
        %v1191 = vshrl.u32 %v1190, 7
        %v1192 = vsub.s32 0, %v1191
        %v1193 = vrot.slane %v1189, %v1192
        %v1195 = vsel %vm219, %v1179, 0
        %v1198 = vsel %vm219, %v1180, 0
        %v1201 = vsel %vm219, %v1181, 0
        %v1204 = vsel %vm219, %v1182, 0
        %1206 = vmatprep.subr.mxu0 0.0
        %1207 = vmatpush1.msra.mxu0 0.0
        %1208 = vmatprep.subr.mxu0 0.0
        %1209 = vmatpush1.msra.mxu0 0.0
        %1210 = vmatprep.subr.mxu0 0.0
        %1211 = vmatpush1.msra.mxu0 0.0
        %1212 = vmatprep.subr.mxu0 0.0
        %1213 = vmatpush1.msra.mxu0 0.0
        %1214 = vmatprep.subr.mxu0 0.0
        %1215 = vmatpush1.msra.mxu0 0.0
        %1216 = vmatprep.subr.mxu0 0.0
        %1217 = vmatpush1.msra.mxu0 0.0
        %1218 = vmatprep.subr.mxu0 0.0
        %1219 = vmatpush1.msra.mxu0 0.0
        %1220 = vmatprep.subr.mxu0 0.0
        %1221 = vmatpush1.msra.mxu0 0.0
        %1222 = vmatprep.subr.mxu0 0.0
        %1223 = vmatpush1.msra.mxu0 0.0
        %1224 = vmatprep.subr.mxu0 0.0
        %1225 = vmatpush1.msra.mxu0 0.0
        %1226 = vmatprep.subr.mxu0 0.0
        %1227 = vmatpush1.msra.mxu0 %v1188
        %1228 = vmatprep.subr.mxu0 0.0
        %1229 = vmatpush1.msra.mxu0 %v1187
        %1230 = vmatprep.subr.mxu0 0.0
        %1231 = vmatpush1.msra.mxu0 %v1186
        %1232 = vmatprep.subr.mxu0 0.0
        %1233 = vmatpush1.msra.mxu0 %v1185
        %1234 = vmatprep.subr.mxu0 0.0
        %1235 = vmatpush1.msra.mxu0 %v1184
        %1236 = vmatprep.subr.mxu0 0.0
        %1237 = vmatpush1.msra.mxu0 %v1183
        %1238 = vmatprep.subr.mxu0 0.0
        %1239 = vmatpush2.msra.mxu0 0.0
        %1240 = vmatprep.subr.mxu0 0.0
        %1241 = vmatpush2.msra.mxu0 0.0
        %1242 = vmatprep.subr.mxu0 0.0
        %1243 = vmatpush2.msra.mxu0 0.0
        %1244 = vmatprep.subr.mxu0 0.0
        %1245 = vmatpush2.msra.mxu0 0.0
        %1246 = vmatprep.subr.mxu0 0.0
        %1247 = vmatpush2.msra.mxu0 0.0
        %1248 = vmatprep.subr.mxu0 0.0
        %1249 = vmatpush2.msra.mxu0 0.0
        %1250 = vmatprep.subr.mxu0 0.0
        %1251 = vmatpush2.msra.mxu0 0.0
        %1252 = vmatprep.subr.mxu0 0.0
        %1253 = vmatpush2.msra.mxu0 0.0
        %1254 = vmatprep.subr.mxu0 0.0
        %1255 = vmatpush2.msra.mxu0 0.0
        %1256 = vmatprep.subr.mxu0 0.0
        %1257 = vmatpush2.msra.mxu0 0.0
        %1258 = vmatprep.subr.mxu0 0.0
        %1259 = vmatpush2.msra.mxu0 0.0
        %1260 = vmatprep.subr.mxu0 0.0
        %1261 = vmatpush2.msra.mxu0 0.0
        %1262 = vmatprep.subr.mxu0 0.0
        %1263 = vmatpush2.msra.mxu0 0.0
        %1264 = vmatprep.subr.mxu0 0.0
        %1265 = vmatpush2.msra.mxu0 0.0
        %1266 = vmatprep.subr.mxu0 0.0
        %1267 = vmatpush2.msra.mxu0 0.0
        %1268 = vmatprep.subr.mxu0 0.0
        %1269 = vmatpush2.msra.mxu0 0.0
        %1270 = vmatprep.mubr.f32.mxu0 0.0
        %1271 = vmatmul.mubr.f32.gmra.mxu0 %v1195
        %v1272 = vpop.f32.mrf.mxu0
        %v1273 = vadd.f32 %v1193, %v1272
        %v1274 = vpop.f32.mrf.mxu0
        %1275 = vmatprep.mubr.f32.mxu0 0.0
        %1276 = vmatmul.mubr.f32.gmra.mxu0 %v1198
        %v1277 = vpop.f32.mrf.mxu0
        %v1278 = vadd.f32 %v1193, %v1277
        %v1279 = vpop.f32.mrf.mxu0
        %1280 = vmatprep.mubr.f32.mxu0 0.0
        %1281 = vmatmul.mubr.f32.gmra.mxu0 %v1201
        %v1282 = vpop.f32.mrf.mxu0
        %v1283 = vadd.f32 %v1193, %v1282
        %v1284 = vpop.f32.mrf.mxu0
        %1285 = vmatprep.mubr.f32.mxu0 0.0
        %1286 = vmatmul.mubr.f32.gmra.mxu0 %v1204
        %v1287 = vpop.f32.mrf.mxu0
        %v1288 = vadd.f32 %v1193, %v1287
        %v1289 = vpop.f32.mrf.mxu0
        %1290 = vdwg.mxu0
        %v1291 = vmax.f32 %v1273, 0.0
        %v1292 = vmax.f32 %v1278, 0.0
        %v1293 = vmax.f32 %v1283, 0.0
        %v1294 = vmax.f32 %v1288, 0.0
        %1299 = vrot.lane.b32.xlu0 %v1291, 96
        %v1300 = vpop.permute.xlu0 %1299
        %1301 = vrot.lane.b32.xlu0 %v1292, 96
        %v1302 = vpop.permute.xlu0 %1301
        %1303 = vrot.lane.b32.xlu0 %v1293, 96
        %v1304 = vpop.permute.xlu0 %1303
        %1305 = vrot.lane.b32.xlu0 %v1294, 96
        %v1306 = vpop.permute.xlu0 %1305
        %v1311 = vmax.f32 %v1291, %v1300
        %v1312 = vmax.f32 %v1292, %v1302
        %v1313 = vmax.f32 %v1293, %v1304
        %v1314 = vmax.f32 %v1294, %v1306
        %1315 = vrot.lane.b32.xlu0 %v1291, 64
        %v1316 = vpop.permute.xlu0 %1315
        %1317 = vrot.lane.b32.xlu0 %v1292, 64
        %v1318 = vpop.permute.xlu0 %1317
        %1319 = vrot.lane.b32.xlu0 %v1293, 64
        %v1320 = vpop.permute.xlu0 %1319
        %1321 = vrot.lane.b32.xlu0 %v1294, 64
        %v1322 = vpop.permute.xlu0 %1321
        %v1327 = vmax.f32 %v1311, %v1316
        %v1328 = vmax.f32 %v1312, %v1318
        %v1329 = vmax.f32 %v1313, %v1320
        %v1330 = vmax.f32 %v1314, %v1322
        %v1331 = vld [vmem:[#allocation6 + $0x240] sm:$0xff]
        %v1332 = vld [vmem:[#allocation6 + $0x248] sm:$0xff]
        %v1333 = vld [vmem:[#allocation6 + $0x250] sm:$0xff]
        %v1334 = vld [vmem:[#allocation6 + $0x258] sm:$0xff]
        %v1335 = vld [vmem:[#allocation6 + $0x260] sm:$0x1]
        %v1336 = vlaneseq
        %v1337 = vshrl.u32 %v1336, 7
        %v1338 = vsub.s32 0, %v1337
        %v1339 = vrot.slane %v1335, %v1338
        %vm1340 = vcmask 261120
        %v1342 = vsel %vm1340, %v1327, 0
        %v1345 = vsel %vm1340, %v1328, 0
        %v1348 = vsel %vm1340, %v1329, 0
        %v1351 = vsel %vm1340, %v1330, 0
        %1353 = vmatprep.subr.mxu0 0.0
        %1354 = vmatpush1.msra.mxu0 0.0
        %1355 = vmatprep.subr.mxu0 0.0
        %1356 = vmatpush1.msra.mxu0 0.0
        %1357 = vmatprep.subr.mxu0 0.0
        %1358 = vmatpush1.msra.mxu0 0.0
        %1359 = vmatprep.subr.mxu0 0.0
        %1360 = vmatpush1.msra.mxu0 0.0
        %1361 = vmatprep.subr.mxu0 0.0
        %1362 = vmatpush1.msra.mxu0 0.0
        %1363 = vmatprep.subr.mxu0 0.0
        %1364 = vmatpush1.msra.mxu0 0.0
        %1365 = vmatprep.subr.mxu0 0.0
        %1366 = vmatpush1.msra.mxu0 0.0
        %1367 = vmatprep.subr.mxu0 0.0
        %1368 = vmatpush1.msra.mxu0 0.0
        %1369 = vmatprep.subr.mxu0 0.0
        %1370 = vmatpush1.msra.mxu0 0.0
        %1371 = vmatprep.subr.mxu0 0.0
        %1372 = vmatpush1.msra.mxu0 0.0
        %1373 = vmatprep.subr.mxu0 0.0
        %1374 = vmatpush1.msra.mxu0 0.0
        %1375 = vmatprep.subr.mxu0 0.0
        %1376 = vmatpush1.msra.mxu0 0.0
        %1377 = vmatprep.subr.mxu0 0.0
        %1378 = vmatpush1.msra.mxu0 %v1334
        %1379 = vmatprep.subr.mxu0 0.0
        %1380 = vmatpush1.msra.mxu0 %v1333
        %1381 = vmatprep.subr.mxu0 0.0
        %1382 = vmatpush1.msra.mxu0 %v1332
        %1383 = vmatprep.subr.mxu0 0.0
        %1384 = vmatpush1.msra.mxu0 %v1331
        %1385 = vmatprep.subr.mxu0 0.0
        %1386 = vmatpush2.msra.mxu0 0.0
        %1387 = vmatprep.subr.mxu0 0.0
        %1388 = vmatpush2.msra.mxu0 0.0
        %1389 = vmatprep.subr.mxu0 0.0
        %1390 = vmatpush2.msra.mxu0 0.0
        %1391 = vmatprep.subr.mxu0 0.0
        %1392 = vmatpush2.msra.mxu0 0.0
        %1393 = vmatprep.subr.mxu0 0.0
        %1394 = vmatpush2.msra.mxu0 0.0
        %1395 = vmatprep.subr.mxu0 0.0
        %1396 = vmatpush2.msra.mxu0 0.0
        %1397 = vmatprep.subr.mxu0 0.0
        %1398 = vmatpush2.msra.mxu0 0.0
        %1399 = vmatprep.subr.mxu0 0.0
        %1400 = vmatpush2.msra.mxu0 0.0
        %1401 = vmatprep.subr.mxu0 0.0
        %1402 = vmatpush2.msra.mxu0 0.0
        %1403 = vmatprep.subr.mxu0 0.0
        %1404 = vmatpush2.msra.mxu0 0.0
        %1405 = vmatprep.subr.mxu0 0.0
        %1406 = vmatpush2.msra.mxu0 0.0
        %1407 = vmatprep.subr.mxu0 0.0
        %1408 = vmatpush2.msra.mxu0 0.0
        %1409 = vmatprep.subr.mxu0 0.0
        %1410 = vmatpush2.msra.mxu0 0.0
        %1411 = vmatprep.subr.mxu0 0.0
        %1412 = vmatpush2.msra.mxu0 0.0
        %1413 = vmatprep.subr.mxu0 0.0
        %1414 = vmatpush2.msra.mxu0 0.0
        %1415 = vmatprep.subr.mxu0 0.0
        %1416 = vmatpush2.msra.mxu0 0.0
        %1417 = vmatprep.mubr.f32.mxu0 0.0
        %1418 = vmatmul.mubr.f32.gmra.mxu0 %v1342
        %v1419 = vpop.f32.mrf.mxu0
        %v1420 = vpop.f32.mrf.mxu0
        %1421 = vmatprep.mubr.f32.mxu0 0.0
        %1422 = vmatmul.mubr.f32.gmra.mxu0 %v1345
        %v1423 = vpop.f32.mrf.mxu0
        %v1424 = vpop.f32.mrf.mxu0
        %1425 = vmatprep.mubr.f32.mxu0 0.0
        %1426 = vmatmul.mubr.f32.gmra.mxu0 %v1348
        %v1427 = vpop.f32.mrf.mxu0
        %v1428 = vadd.f32 %v1339, %v1427
        %v1429 = vpop.f32.mrf.mxu0
        %1430 = vmatprep.mubr.f32.mxu0 0.0
        %1431 = vmatmul.mubr.f32.gmra.mxu0 %v1351
        %v1432 = vpop.f32.mrf.mxu0
        %v1433 = vpop.f32.mrf.mxu0
        %1434 = vdwg.mxu0
        %v1435 = vpack.c.bf16 %v1428, %v1428
        %1436 = vst [vmem:[%s194] sm:$0xf] %v1435
        %s1437 = sand.u32 %s91, 1
        %s1438 = scalar_lea.sflag [#allocation5], %s1437
        %s1439 = sand.u32 %s91, 1
        %s1440 = smul.addr %s1439, 4
        %s1441 = scalar_lea.vmem [#allocation8], %s1440
        // Predicated region
        $region37: #{tpu_custom_call.1} parent=27 // pred_check
          %p1442 = pneg %p101
        $region38: #{tpu_custom_call.1} parent=27 // pred_check_branch
          %1444 = sbr.rel (%p1442) target = $region40
        $region39: #{tpu_custom_call.1} parent=27 // pred_region
          %s1446 = ssub.s32 64, 64
          %1447 = vsyncadd %s1438, %s1446
          %s1448 = smul.addr %s24, 2
          %s1449 = sadd.s32 %s25, %s1448
          %s1450 = smul.addr %s1449, 64
          %s1451 = scalar_lea.hbm %s2, %s1450
          %s1453 = sshll.u32 %s1441, 4
          %s1454 = int_to_ptr.vmem [resolvable:$true] %s1453
          %1456 = dma.vmem_to_hbm [thread:$0]  %s1454, 64, %s1451, %s1438
        $region40: #{tpu_custom_call.1} parent=27 // pred_fallthru
          _
      $region28: #{tpu_custom_call.1} parent=5 // pred_fallthru
        _
      %p1457 = scmp.le.s32.totalorder 2, %s15
      // Predicated region
      $region41: #{tpu_custom_call.1} parent=5 // pred_check
        %p1458 = pneg %p1457
      $region42: #{tpu_custom_call.1} parent=5 // pred_check_branch
        %1460 = sbr.rel (%p1458) target = $region44
      $region43: #{tpu_custom_call.1} parent=5 // pred_region
        %s1461 = ssub.s32 %s15, 2
        // Predicated region
        $region45: #{tpu_custom_call.1} parent=43 // pred_check
          %p1462 = pneg %p107
        $region46: #{tpu_custom_call.1} parent=43 // pred_check_branch
          %1464 = sbr.rel (%p1462) target = $region48
        $region47: #{tpu_custom_call.1} parent=43 // pred_region
          %s1465 = sand.u32 %s92, 1
          %s1466 = scalar_lea.sflag [#allocation5], %s1465
          %s1467 = sand.u32 %s92, 1
          %s1468 = smul.addr %s1467, 4
          %s1469 = scalar_lea.vmem [#allocation8], %s1468
          %1470 = dma.done %s1466, 64
        $region48: #{tpu_custom_call.1} parent=43 // pred_fallthru
          _
      $region44: #{tpu_custom_call.1} parent=5 // pred_fallthru
        _
    $region6: #{tpu_custom_call.1} parent=1 // loop_footer
      %s19 = sadd.s32 1, %s15
    $region7: #{tpu_custom_call.1} parent=1 // loop_footer_branch
      %14 = sbr.rel target = $region3
    $region8: #{tpu_custom_call.1} parent=1 // loop_exit
      _
    %1471 = vsyncpa [#allocation4], 1
    %s1472 = scalar_lea.sflag [#allocation4], 1
    %1473 = vsyncpa %s1472, 1
    %1474 = vsyncpa [#allocation7], 1
    %1475 = vsyncpa [#allocation5], 1
    %s1476 = scalar_lea.sflag [#allocation5], 1
    %1477 = vsyncpa %s1476, 1

</llo_original>
